<compile_context>
chip_gen: v5e
topology: v5e:2x2
jax: 0.10.0
libtpu: 0.0.40
codegen_flags: <defaults>
</compile_context>

<pallas_src>
import jax
import jax.numpy as jnp
from jax.experimental import pallas as pl
from jax.experimental.pallas import tpu as pltpu

# ---- small synthetic stand-in config for bert-base-uncased ----
VOCAB = 100
HIDDEN = 32
N_HEADS = 2
HEAD_DIM = HIDDEN // N_HEADS
FFN = 64
N_LAYERS = 2
MAX_POS = 16
NUM_LABELS = 3
LN_EPS = 1e-12
LANE = 128                      # lane-dense padded width for the logits output


def _layernorm(x, gamma, beta):
    mu = jnp.mean(x, axis=-1, keepdims=True)
    var = jnp.mean((x - mu) ** 2, axis=-1, keepdims=True)
    return (x - mu) * jax.lax.rsqrt(var + LN_EPS) * gamma + beta


def _erf(x):
    # Abramowitz & Stegun 7.1.26 (|error| < 1.5e-7): only exp/mul/add/select,
    # guaranteed to lower on the VPU/EUP paths of v5e/v6e/v7x.
    a1, a2, a3, a4, a5 = 0.254829592, -0.284496736, 1.421413741, -1.453152027, 1.061405429
    p = 0.3275911
    sgn = jnp.where(x >= 0.0, 1.0, -1.0)
    z = jnp.abs(x)
    t = 1.0 / (1.0 + p * z)
    poly = ((((a5 * t + a4) * t + a3) * t + a2) * t + a1) * t
    return sgn * (1.0 - poly * jnp.exp(-z * z))


def _gelu_exact(x):
    # Exact-erf GELU (the HF / PyTorch BERT activation), not the tanh approx.
    return 0.5 * x * (1.0 + _erf(x * 0.7071067811865476))


# ----------------------------------------------------------------------------
# Single fused kernel: embedding LayerNorm + N_LAYERS encoder layers +
# pooler (tanh) + dropout(eval, identity) + classifier linear.
# ----------------------------------------------------------------------------
def classifier_fwd_kernel(x_ref, emb_ln_ref,
                          w_qkvo_ref, w_ff1_ref, w_ff2_ref, vec_ref, b_ff1_ref,
                          pool_w_ref, pool_b_ref, cls_w_ref, cls_b_ref,
                          o_ref):
    B, S, H = x_ref.shape
    BS = B * S

    # ---- embedding LayerNorm (fused; no standalone launch / HBM round trip)
    x = x_ref[...].astype(jnp.float32).reshape(BS, H)          # batch folded into M
    emb_ln = emb_ln_ref[...]                                   # [2, H]: gamma, beta
    x = _layernorm(x, emb_ln[0:1], emb_ln[1:2])

    scale = 1.0 / (HEAD_DIM ** 0.5)

    for l in range(N_LAYERS):                                  # static unroll
        slab = w_qkvo_ref[l]                                   # [H, 4H]  (Wq|Wk|Wv|Wo)
        vecs = vec_ref[l]                                      # [9, H] packed rows:
        # 0:bq 1:bk 2:bv 3:bo 4:ln1_g 5:ln1_b 6:bff2 7:ln2_g 8:ln2_b

        # fused QKV projection: one [BS,H] x [H,3H] MXU push
        qkv = jnp.dot(x, slab[:, 0:3 * H], preferred_element_type=jnp.float32)
        q = (qkv[:, 0:H] + vecs[0:1]) * scale                  # scale folded into q
        k = qkv[:, H:2 * H] + vecs[1:2]
        v = qkv[:, 2 * H:3 * H] + vecs[2:3]
        wo = slab[:, 3 * H:4 * H]                              # [H, H]

        q3 = q.reshape(B, S, H)
        k3 = k.reshape(B, S, H)
        v3 = v.reshape(B, S, H)

        # TODO(synk): attention_mask from tokenizer padding is not modeled; the
        # synthetic batch has no padding so all key positions are attended.
        attn = jnp.zeros((BS, H), jnp.float32)
        for h in range(N_HEADS):                               # static unroll
            sl = slice(h * HEAD_DIM, (h + 1) * HEAD_DIM)
            s = jnp.einsum('bqd,bkd->bqk', q3[:, :, sl], k3[:, :, sl],
                           preferred_element_type=jnp.float32)         # [B,S,S]
            s = s - jnp.max(s, axis=-1, keepdims=True)
            p = jnp.exp(s)
            p = p * pl.reciprocal(jnp.sum(p, axis=-1, keepdims=True), approx=True)
            ctx = jnp.einsum('bqk,bkd->bqd', p, v3[:, :, sl],
                             preferred_element_type=jnp.float32)        # [B,S,Dh]
            # accumulate through the output projection: no lane-axis concat
            attn = attn + jnp.dot(ctx.reshape(BS, HEAD_DIM), wo[sl, :],
                                  preferred_element_type=jnp.float32)
        attn = attn + vecs[3:4]                                # bo

        h1 = _layernorm(x + attn, vecs[4:5], vecs[5:6])

        ff = jnp.dot(h1, w_ff1_ref[l], preferred_element_type=jnp.float32) + b_ff1_ref[l]
        ff = _gelu_exact(ff)
        ff = jnp.dot(ff, w_ff2_ref[l], preferred_element_type=jnp.float32) + vecs[6:7]
        x = _layernorm(h1 + ff, vecs[7:8], vecs[8:9])

    # ---- pooler + dropout(eval = identity) + classifier head (lane-dense out)
    cls = x.reshape(B, S, H)[:, 0, :]                          # [CLS] token, [B, H]
    pooled = jnp.tanh(
        jnp.dot(cls, pool_w_ref[...], preferred_element_type=jnp.float32)
        + pool_b_ref[...])
    # nn.Dropout(0.3) is identity in eval / inference mode.
    logits = jnp.dot(pooled, cls_w_ref[...], preferred_element_type=jnp.float32) \
        + cls_b_ref[...]                                       # [B, 128] (padded)
    o_ref[...] = logits.astype(o_ref.dtype)


def classifier_forward(params, input_ids):
    """Classifier.forward equivalent, starting from token ids."""
    B, S = input_ids.shape
    # embedding gathers are glue in JAX; everything else runs in one Pallas call
    x = (params["word_emb"][input_ids]
         + params["pos_emb"][:S][None, :, :]
         + params["type_emb"][0][None, None, :])

    logits_pad = pl.pallas_call(
        classifier_fwd_kernel,
        out_shape=jax.ShapeDtypeStruct((B, LANE), jnp.float32),
    )(x, params["emb_ln"],
      params["w_qkvo"], params["w_ff1"], params["w_ff2"],
      params["vecs"], params["b_ff1"],
      params["pool_w"], params["pool_b"],
      params["cls_w_pad"], params["cls_b_pad"])

    return logits_pad[:, :NUM_LABELS]


# ----------------------------------------------------------------------------
# Parameter init (deterministic, synthetic stand-in for the pretrained weights)
# ----------------------------------------------------------------------------
def init_params(key):
    keys = iter(jax.random.split(key, 3 + 6 * N_LAYERS + 2))

    def dense(shape):
        return jax.random.normal(next(keys), shape, jnp.float32) * 0.02

    H = HIDDEN
    zeros_h = jnp.zeros((1, H), jnp.float32)
    ones_h = jnp.ones((1, H), jnp.float32)

    params = {
        "word_emb": dense((VOCAB, H)),
        "pos_emb": dense((MAX_POS, H)),
        "type_emb": dense((2, H)),
        # packed [gamma; beta] for the embedding LayerNorm
        "emb_ln": jnp.concatenate([ones_h, zeros_h], axis=0),
        "pool_w": dense((H, H)),
        "pool_b": jnp.zeros((1, H), jnp.float32),
    }

    w_qkvo, w_ff1, w_ff2, vecs, b_ff1 = [], [], [], [], []
    for _ in range(N_LAYERS):
        wq, wk, wv, wo = dense((H, H)), dense((H, H)), dense((H, H)), dense((H, H))
        w_qkvo.append(jnp.concatenate([wq, wk, wv, wo], axis=1))          # [H, 4H]
        w_ff1.append(dense((H, FFN)))
        w_ff2.append(dense((FFN, H)))
        # rows: bq, bk, bv, bo, ln1_gamma, ln1_beta, b_ff2, ln2_gamma, ln2_beta
        vecs.append(jnp.concatenate(
            [zeros_h, zeros_h, zeros_h, zeros_h,
             ones_h, zeros_h, zeros_h, ones_h, zeros_h], axis=0))         # [9, H]
        b_ff1.append(jnp.zeros((1, FFN), jnp.float32))

    params["w_qkvo"] = jnp.stack(w_qkvo)          # [L, H, 4H]
    params["w_ff1"] = jnp.stack(w_ff1)            # [L, H, FFN]
    params["w_ff2"] = jnp.stack(w_ff2)            # [L, FFN, H]
    params["vecs"] = jnp.stack(vecs)              # [L, 9, H]
    params["b_ff1"] = jnp.stack(b_ff1)            # [L, 1, FFN]

    cls_w = dense((H, NUM_LABELS))
    # pad the classifier head to 128 output lanes -> unmasked lane-dense stores
    params["cls_w_pad"] = jnp.pad(cls_w, ((0, 0), (0, LANE - NUM_LABELS)))
    params["cls_b_pad"] = jnp.zeros((1, LANE), jnp.float32)
    return params


if __name__ == "__main__":
    key = jax.random.PRNGKey(0)
    ids_key, param_key = jax.random.split(key)

    B, S = 2, 8
    # TODO(synk): BertTokenizer (string -> ids) has no Pallas/JAX equivalent;
    # we substitute deterministic synthetic token ids for the encoded batch.
    input_ids = jax.random.randint(ids_key, (B, S), 0, VOCAB, dtype=jnp.int32)

    params = init_params(param_key)
    logits = classifier_forward(params, input_ids)
    logits = jax.block_until_ready(logits)

    assert logits.shape == (B, NUM_LABELS), logits.shape
    assert bool(jnp.all(jnp.isfinite(logits)))
    print("KERNEL_OK")
</pallas_src>

<mosaic_0001>
module attributes {stable_mosaic.version = 11 : i64} {
  func.func @classifier_fwd_kernel(%arg0: memref<2x8x32xf32, #tpu.memory_space<vmem>>, %arg1: memref<2x32xf32, #tpu.memory_space<vmem>>, %arg2: memref<2x32x128xf32, #tpu.memory_space<vmem>>, %arg3: memref<2x32x64xf32, #tpu.memory_space<vmem>>, %arg4: memref<2x64x32xf32, #tpu.memory_space<vmem>>, %arg5: memref<2x9x32xf32, #tpu.memory_space<vmem>>, %arg6: memref<2x1x64xf32, #tpu.memory_space<vmem>>, %arg7: memref<32x32xf32, #tpu.memory_space<vmem>>, %arg8: memref<1x32xf32, #tpu.memory_space<vmem>>, %arg9: memref<32x128xf32, #tpu.memory_space<vmem>>, %arg10: memref<1x128xf32, #tpu.memory_space<vmem>>, %arg11: memref<2x128xf32, #tpu.memory_space<vmem>>) attributes {dimension_semantics = [], scalar_prefetch = 0 : i64, scratch_operands = 0 : i64, tpu.core_type = #tpu.core_type<tc>} {
    %c0 = arith.constant 0 : index
    %c0_0 = arith.constant 0 : index
    %c0_1 = arith.constant 0 : index
    %0 = vector.load %arg0[%c0, %c0_0, %c0_1] : memref<2x8x32xf32, #tpu.memory_space<vmem>>, vector<2x8x32xf32>
    %1 = vector.shape_cast %0 : vector<2x8x32xf32> to vector<16x32xf32>
    %c0_2 = arith.constant 0 : index
    %c0_3 = arith.constant 0 : index
    %2 = vector.load %arg1[%c0_2, %c0_3] : memref<2x32xf32, #tpu.memory_space<vmem>>, vector<2x32xf32>
    %3 = vector.extract_strided_slice %2 {offsets = [0, 0], sizes = [1, 32], strides = [1, 1]} : vector<2x32xf32> to vector<1x32xf32>
    %4 = vector.extract_strided_slice %2 {offsets = [1, 0], sizes = [1, 32], strides = [1, 1]} : vector<2x32xf32> to vector<1x32xf32>
    %cst = arith.constant dense<0.000000e+00> : vector<16xf32>
    %5 = vector.multi_reduction <add>, %1, %cst [1] : vector<16x32xf32> to vector<16xf32>
    %6 = vector.shape_cast %5 : vector<16xf32> to vector<16x1xf32>
    %cst_4 = arith.constant 3.200000e+01 : f32
    %7 = vector.broadcast %cst_4 : f32 to vector<16x1xf32>
    %8 = arith.divf %6, %7 : vector<16x1xf32>
    %9 = vector.broadcast %8 : vector<16x1xf32> to vector<16x32xf32>
    %10 = arith.subf %1, %9 : vector<16x32xf32>
    %11 = arith.mulf %10, %10 : vector<16x32xf32>
    %cst_5 = arith.constant dense<0.000000e+00> : vector<16xf32>
    %12 = vector.multi_reduction <add>, %11, %cst_5 [1] : vector<16x32xf32> to vector<16xf32>
    %13 = vector.shape_cast %12 : vector<16xf32> to vector<16x1xf32>
    %cst_6 = arith.constant 3.200000e+01 : f32
    %14 = vector.broadcast %cst_6 : f32 to vector<16x1xf32>
    %15 = arith.divf %13, %14 : vector<16x1xf32>
    %16 = vector.broadcast %8 : vector<16x1xf32> to vector<16x32xf32>
    %17 = arith.subf %1, %16 : vector<16x32xf32>
    %cst_7 = arith.constant 9.99999996E-13 : f32
    %18 = vector.broadcast %cst_7 : f32 to vector<16x1xf32>
    %19 = arith.addf %15, %18 : vector<16x1xf32>
    %20 = math.rsqrt %19 : vector<16x1xf32>
    %21 = vector.broadcast %20 : vector<16x1xf32> to vector<16x32xf32>
    %22 = arith.mulf %17, %21 : vector<16x32xf32>
    %23 = vector.broadcast %3 : vector<1x32xf32> to vector<16x32xf32>
    %24 = arith.mulf %22, %23 : vector<16x32xf32>
    %25 = vector.broadcast %4 : vector<1x32xf32> to vector<16x32xf32>
    %26 = arith.addf %24, %25 : vector<16x32xf32>
    %c0_8 = arith.constant 0 : index
    %c0_9 = arith.constant 0 : index
    %c0_10 = arith.constant 0 : index
    %27 = vector.load %arg2[%c0_8, %c0_9, %c0_10] : memref<2x32x128xf32, #tpu.memory_space<vmem>>, vector<1x32x128xf32>
    %28 = vector.shape_cast %27 : vector<1x32x128xf32> to vector<32x128xf32>
    %c0_11 = arith.constant 0 : index
    %c0_12 = arith.constant 0 : index
    %c0_13 = arith.constant 0 : index
    %29 = vector.load %arg5[%c0_11, %c0_12, %c0_13] : memref<2x9x32xf32, #tpu.memory_space<vmem>>, vector<1x9x32xf32>
    %30 = vector.shape_cast %29 : vector<1x9x32xf32> to vector<9x32xf32>
    %31 = vector.extract_strided_slice %28 {offsets = [0, 0], sizes = [32, 96], strides = [1, 1]} : vector<32x128xf32> to vector<32x96xf32>
    %cst_14 = arith.constant dense<0.000000e+00> : vector<16x96xf32>
    %32 = tpu.matmul %26, %31, %cst_14 {dimension_numbers = #tpu.dot_dimension_numbers<[1], [0], [0], [1], [0, 0, 1, 1], [], []>} : vector<16x32xf32>, vector<32x96xf32>, vector<16x96xf32> -> vector<16x96xf32>
    %33 = vector.extract_strided_slice %32 {offsets = [0, 0], sizes = [16, 32], strides = [1, 1]} : vector<16x96xf32> to vector<16x32xf32>
    %34 = vector.extract_strided_slice %30 {offsets = [0, 0], sizes = [1, 32], strides = [1, 1]} : vector<9x32xf32> to vector<1x32xf32>
    %35 = vector.broadcast %34 : vector<1x32xf32> to vector<16x32xf32>
    %36 = arith.addf %33, %35 : vector<16x32xf32>
    %cst_15 = arith.constant 2.500000e-01 : f32
    %37 = vector.broadcast %cst_15 : f32 to vector<16x32xf32>
    %38 = arith.mulf %36, %37 : vector<16x32xf32>
    %39 = vector.extract_strided_slice %32 {offsets = [0, 32], sizes = [16, 32], strides = [1, 1]} : vector<16x96xf32> to vector<16x32xf32>
    %40 = vector.extract_strided_slice %30 {offsets = [1, 0], sizes = [1, 32], strides = [1, 1]} : vector<9x32xf32> to vector<1x32xf32>
    %41 = vector.broadcast %40 : vector<1x32xf32> to vector<16x32xf32>
    %42 = arith.addf %39, %41 : vector<16x32xf32>
    %43 = vector.extract_strided_slice %32 {offsets = [0, 64], sizes = [16, 32], strides = [1, 1]} : vector<16x96xf32> to vector<16x32xf32>
    %44 = vector.extract_strided_slice %30 {offsets = [2, 0], sizes = [1, 32], strides = [1, 1]} : vector<9x32xf32> to vector<1x32xf32>
    %45 = vector.broadcast %44 : vector<1x32xf32> to vector<16x32xf32>
    %46 = arith.addf %43, %45 : vector<16x32xf32>
    %47 = vector.extract_strided_slice %28 {offsets = [0, 96], sizes = [32, 32], strides = [1, 1]} : vector<32x128xf32> to vector<32x32xf32>
    %48 = vector.shape_cast %38 : vector<16x32xf32> to vector<2x8x32xf32>
    %49 = vector.shape_cast %42 : vector<16x32xf32> to vector<2x8x32xf32>
    %50 = vector.shape_cast %46 : vector<16x32xf32> to vector<2x8x32xf32>
    %cst_16 = arith.constant 0.000000e+00 : f32
    %51 = vector.broadcast %cst_16 : f32 to vector<16x32xf32>
    %52 = vector.extract_strided_slice %48 {offsets = [0, 0, 0], sizes = [2, 8, 16], strides = [1, 1, 1]} : vector<2x8x32xf32> to vector<2x8x16xf32>
    %53 = vector.extract_strided_slice %49 {offsets = [0, 0, 0], sizes = [2, 8, 16], strides = [1, 1, 1]} : vector<2x8x32xf32> to vector<2x8x16xf32>
    "tpu.trace_start"() <{level = 10 : i32, message = "bqd,bkd->bqk"}> : () -> ()
    %cst_17 = arith.constant dense<0.000000e+00> : vector<2x8x8xf32>
    %54 = tpu.matmul %52, %53, %cst_17 {dimension_numbers = #tpu.dot_dimension_numbers<[2], [2], [1], [1], [0, 0, 0, 1, 1, 1], [0], [0]>} : vector<2x8x16xf32>, vector<2x8x16xf32>, vector<2x8x8xf32> -> vector<2x8x8xf32>
    "tpu.trace_stop"() : () -> ()
    %cst_18 = arith.constant dense<0xFF800000> : vector<2x8xf32>
    %55 = vector.multi_reduction <maximumf>, %54, %cst_18 [2] : vector<2x8x8xf32> to vector<2x8xf32>
    %56 = vector.shape_cast %55 : vector<2x8xf32> to vector<2x8x1xf32>
    %57 = vector.broadcast %56 : vector<2x8x1xf32> to vector<2x8x8xf32>
    %58 = arith.subf %54, %57 : vector<2x8x8xf32>
    %59 = math.exp %58 : vector<2x8x8xf32>
    %cst_19 = arith.constant dense<0.000000e+00> : vector<2x8xf32>
    %60 = vector.multi_reduction <add>, %59, %cst_19 [2] : vector<2x8x8xf32> to vector<2x8xf32>
    %61 = vector.shape_cast %60 : vector<2x8xf32> to vector<2x8x1xf32>
    %62 = tpu.reciprocal %61 {approx = true} : vector<2x8x1xf32> -> vector<2x8x1xf32>
    %63 = vector.broadcast %62 : vector<2x8x1xf32> to vector<2x8x8xf32>
    %64 = arith.mulf %59, %63 : vector<2x8x8xf32>
    %65 = vector.extract_strided_slice %50 {offsets = [0, 0, 0], sizes = [2, 8, 16], strides = [1, 1, 1]} : vector<2x8x32xf32> to vector<2x8x16xf32>
    "tpu.trace_start"() <{level = 10 : i32, message = "bqk,bkd->bqd"}> : () -> ()
    %cst_20 = arith.constant dense<0.000000e+00> : vector<2x8x16xf32>
    %66 = tpu.matmul %64, %65, %cst_20 {dimension_numbers = #tpu.dot_dimension_numbers<[2], [1], [1], [2], [0, 0, 0, 1, 1, 2], [0], [0]>} : vector<2x8x8xf32>, vector<2x8x16xf32>, vector<2x8x16xf32> -> vector<2x8x16xf32>
    "tpu.trace_stop"() : () -> ()
    %67 = vector.shape_cast %66 : vector<2x8x16xf32> to vector<16x16xf32>
    %68 = vector.extract_strided_slice %47 {offsets = [0, 0], sizes = [16, 32], strides = [1, 1]} : vector<32x32xf32> to vector<16x32xf32>
    %cst_21 = arith.constant dense<0.000000e+00> : vector<16x32xf32>
    %69 = tpu.matmul %67, %68, %cst_21 {dimension_numbers = #tpu.dot_dimension_numbers<[1], [0], [0], [1], [0, 0, 1, 1], [], []>} : vector<16x16xf32>, vector<16x32xf32>, vector<16x32xf32> -> vector<16x32xf32>
    %70 = arith.addf %51, %69 : vector<16x32xf32>
    %71 = vector.extract_strided_slice %48 {offsets = [0, 0, 16], sizes = [2, 8, 16], strides = [1, 1, 1]} : vector<2x8x32xf32> to vector<2x8x16xf32>
    %72 = vector.extract_strided_slice %49 {offsets = [0, 0, 16], sizes = [2, 8, 16], strides = [1, 1, 1]} : vector<2x8x32xf32> to vector<2x8x16xf32>
    "tpu.trace_start"() <{level = 10 : i32, message = "bqd,bkd->bqk"}> : () -> ()
    %cst_22 = arith.constant dense<0.000000e+00> : vector<2x8x8xf32>
    %73 = tpu.matmul %71, %72, %cst_22 {dimension_numbers = #tpu.dot_dimension_numbers<[2], [2], [1], [1], [0, 0, 0, 1, 1, 1], [0], [0]>} : vector<2x8x16xf32>, vector<2x8x16xf32>, vector<2x8x8xf32> -> vector<2x8x8xf32>
    "tpu.trace_stop"() : () -> ()
    %cst_23 = arith.constant dense<0xFF800000> : vector<2x8xf32>
    %74 = vector.multi_reduction <maximumf>, %73, %cst_23 [2] : vector<2x8x8xf32> to vector<2x8xf32>
    %75 = vector.shape_cast %74 : vector<2x8xf32> to vector<2x8x1xf32>
    %76 = vector.broadcast %75 : vector<2x8x1xf32> to vector<2x8x8xf32>
    %77 = arith.subf %73, %76 : vector<2x8x8xf32>
    %78 = math.exp %77 : vector<2x8x8xf32>
    %cst_24 = arith.constant dense<0.000000e+00> : vector<2x8xf32>
    %79 = vector.multi_reduction <add>, %78, %cst_24 [2] : vector<2x8x8xf32> to vector<2x8xf32>
    %80 = vector.shape_cast %79 : vector<2x8xf32> to vector<2x8x1xf32>
    %81 = tpu.reciprocal %80 {approx = true} : vector<2x8x1xf32> -> vector<2x8x1xf32>
    %82 = vector.broadcast %81 : vector<2x8x1xf32> to vector<2x8x8xf32>
    %83 = arith.mulf %78, %82 : vector<2x8x8xf32>
    %84 = vector.extract_strided_slice %50 {offsets = [0, 0, 16], sizes = [2, 8, 16], strides = [1, 1, 1]} : vector<2x8x32xf32> to vector<2x8x16xf32>
    "tpu.trace_start"() <{level = 10 : i32, message = "bqk,bkd->bqd"}> : () -> ()
    %cst_25 = arith.constant dense<0.000000e+00> : vector<2x8x16xf32>
    %85 = tpu.matmul %83, %84, %cst_25 {dimension_numbers = #tpu.dot_dimension_numbers<[2], [1], [1], [2], [0, 0, 0, 1, 1, 2], [0], [0]>} : vector<2x8x8xf32>, vector<2x8x16xf32>, vector<2x8x16xf32> -> vector<2x8x16xf32>
    "tpu.trace_stop"() : () -> ()
    %86 = vector.shape_cast %85 : vector<2x8x16xf32> to vector<16x16xf32>
    %87 = vector.extract_strided_slice %47 {offsets = [16, 0], sizes = [16, 32], strides = [1, 1]} : vector<32x32xf32> to vector<16x32xf32>
    %cst_26 = arith.constant dense<0.000000e+00> : vector<16x32xf32>
    %88 = tpu.matmul %86, %87, %cst_26 {dimension_numbers = #tpu.dot_dimension_numbers<[1], [0], [0], [1], [0, 0, 1, 1], [], []>} : vector<16x16xf32>, vector<16x32xf32>, vector<16x32xf32> -> vector<16x32xf32>
    %89 = arith.addf %70, %88 : vector<16x32xf32>
    %90 = vector.extract_strided_slice %30 {offsets = [3, 0], sizes = [1, 32], strides = [1, 1]} : vector<9x32xf32> to vector<1x32xf32>
    %91 = vector.broadcast %90 : vector<1x32xf32> to vector<16x32xf32>
    %92 = arith.addf %89, %91 : vector<16x32xf32>
    %93 = arith.addf %26, %92 : vector<16x32xf32>
    %94 = vector.extract_strided_slice %30 {offsets = [4, 0], sizes = [1, 32], strides = [1, 1]} : vector<9x32xf32> to vector<1x32xf32>
    %95 = vector.extract_strided_slice %30 {offsets = [5, 0], sizes = [1, 32], strides = [1, 1]} : vector<9x32xf32> to vector<1x32xf32>
    %cst_27 = arith.constant dense<0.000000e+00> : vector<16xf32>
    %96 = vector.multi_reduction <add>, %93, %cst_27 [1] : vector<16x32xf32> to vector<16xf32>
    %97 = vector.shape_cast %96 : vector<16xf32> to vector<16x1xf32>
    %cst_28 = arith.constant 3.200000e+01 : f32
    %98 = vector.broadcast %cst_28 : f32 to vector<16x1xf32>
    %99 = arith.divf %97, %98 : vector<16x1xf32>
    %100 = vector.broadcast %99 : vector<16x1xf32> to vector<16x32xf32>
    %101 = arith.subf %93, %100 : vector<16x32xf32>
    %102 = arith.mulf %101, %101 : vector<16x32xf32>
    %cst_29 = arith.constant dense<0.000000e+00> : vector<16xf32>
    %103 = vector.multi_reduction <add>, %102, %cst_29 [1] : vector<16x32xf32> to vector<16xf32>
    %104 = vector.shape_cast %103 : vector<16xf32> to vector<16x1xf32>
    %cst_30 = arith.constant 3.200000e+01 : f32
    %105 = vector.broadcast %cst_30 : f32 to vector<16x1xf32>
    %106 = arith.divf %104, %105 : vector<16x1xf32>
    %107 = vector.broadcast %99 : vector<16x1xf32> to vector<16x32xf32>
    %108 = arith.subf %93, %107 : vector<16x32xf32>
    %cst_31 = arith.constant 9.99999996E-13 : f32
    %109 = vector.broadcast %cst_31 : f32 to vector<16x1xf32>
    %110 = arith.addf %106, %109 : vector<16x1xf32>
    %111 = math.rsqrt %110 : vector<16x1xf32>
    %112 = vector.broadcast %111 : vector<16x1xf32> to vector<16x32xf32>
    %113 = arith.mulf %108, %112 : vector<16x32xf32>
    %114 = vector.broadcast %94 : vector<1x32xf32> to vector<16x32xf32>
    %115 = arith.mulf %113, %114 : vector<16x32xf32>
    %116 = vector.broadcast %95 : vector<1x32xf32> to vector<16x32xf32>
    %117 = arith.addf %115, %116 : vector<16x32xf32>
    %c0_32 = arith.constant 0 : index
    %c0_33 = arith.constant 0 : index
    %c0_34 = arith.constant 0 : index
    %118 = vector.load %arg3[%c0_32, %c0_33, %c0_34] : memref<2x32x64xf32, #tpu.memory_space<vmem>>, vector<1x32x64xf32>
    %119 = vector.shape_cast %118 : vector<1x32x64xf32> to vector<32x64xf32>
    %cst_35 = arith.constant dense<0.000000e+00> : vector<16x64xf32>
    %120 = tpu.matmul %117, %119, %cst_35 {dimension_numbers = #tpu.dot_dimension_numbers<[1], [0], [0], [1], [0, 0, 1, 1], [], []>} : vector<16x32xf32>, vector<32x64xf32>, vector<16x64xf32> -> vector<16x64xf32>
    %c0_36 = arith.constant 0 : index
    %c0_37 = arith.constant 0 : index
    %c0_38 = arith.constant 0 : index
    %121 = vector.load %arg6[%c0_36, %c0_37, %c0_38] : memref<2x1x64xf32, #tpu.memory_space<vmem>>, vector<1x1x64xf32>
    %122 = vector.shape_cast %121 : vector<1x1x64xf32> to vector<1x64xf32>
    %123 = vector.broadcast %122 : vector<1x64xf32> to vector<16x64xf32>
    %124 = arith.addf %120, %123 : vector<16x64xf32>
    %cst_39 = arith.constant 5.000000e-01 : f32
    %125 = vector.broadcast %cst_39 : f32 to vector<16x64xf32>
    %126 = arith.mulf %125, %124 : vector<16x64xf32>
    %cst_40 = arith.constant 0.707106769 : f32
    %127 = vector.broadcast %cst_40 : f32 to vector<16x64xf32>
    %128 = arith.mulf %124, %127 : vector<16x64xf32>
    %cst_41 = arith.constant 0.000000e+00 : f32
    %129 = vector.broadcast %cst_41 : f32 to vector<16x64xf32>
    %130 = arith.cmpf oge, %128, %129 : vector<16x64xf32>
    %cst_42 = arith.constant 1.000000e+00 : f32
    %cst_43 = arith.constant -1.000000e+00 : f32
    %131 = vector.broadcast %cst_42 : f32 to vector<16x64xf32>
    %132 = vector.broadcast %cst_43 : f32 to vector<16x64xf32>
    %133 = arith.select %130, %131, %132 : vector<16x64xi1>, vector<16x64xf32>
    %134 = math.absf %128 : vector<16x64xf32>
    %cst_44 = arith.constant 0.327591091 : f32
    %135 = vector.broadcast %cst_44 : f32 to vector<16x64xf32>
    %136 = arith.mulf %135, %134 : vector<16x64xf32>
    %cst_45 = arith.constant 1.000000e+00 : f32
    %137 = vector.broadcast %cst_45 : f32 to vector<16x64xf32>
    %138 = arith.addf %137, %136 : vector<16x64xf32>
    %cst_46 = arith.constant 1.000000e+00 : f32
    %139 = vector.broadcast %cst_46 : f32 to vector<16x64xf32>
    %140 = arith.divf %139, %138 : vector<16x64xf32>
    %cst_47 = arith.constant 1.06140542 : f32
    %141 = vector.broadcast %cst_47 : f32 to vector<16x64xf32>
    %142 = arith.mulf %141, %140 : vector<16x64xf32>
    %cst_48 = arith.constant -1.45315206 : f32
    %143 = vector.broadcast %cst_48 : f32 to vector<16x64xf32>
    %144 = arith.addf %142, %143 : vector<16x64xf32>
    %145 = arith.mulf %144, %140 : vector<16x64xf32>
    %cst_49 = arith.constant 1.42141378 : f32
    %146 = vector.broadcast %cst_49 : f32 to vector<16x64xf32>
    %147 = arith.addf %145, %146 : vector<16x64xf32>
    %148 = arith.mulf %147, %140 : vector<16x64xf32>
    %cst_50 = arith.constant -0.284496725 : f32
    %149 = vector.broadcast %cst_50 : f32 to vector<16x64xf32>
    %150 = arith.addf %148, %149 : vector<16x64xf32>
    %151 = arith.mulf %150, %140 : vector<16x64xf32>
    %cst_51 = arith.constant 0.254829586 : f32
    %152 = vector.broadcast %cst_51 : f32 to vector<16x64xf32>
    %153 = arith.addf %151, %152 : vector<16x64xf32>
    %154 = arith.mulf %153, %140 : vector<16x64xf32>
    %cst_52 = arith.constant 0.000000e+00 : f32
    %155 = vector.broadcast %cst_52 : f32 to vector<16x64xf32>
    %156 = arith.subf %155, %134 : vector<16x64xf32>
    %157 = arith.mulf %156, %134 : vector<16x64xf32>
    %158 = math.exp %157 : vector<16x64xf32>
    %159 = arith.mulf %154, %158 : vector<16x64xf32>
    %cst_53 = arith.constant 1.000000e+00 : f32
    %160 = vector.broadcast %cst_53 : f32 to vector<16x64xf32>
    %161 = arith.subf %160, %159 : vector<16x64xf32>
    %162 = arith.mulf %133, %161 : vector<16x64xf32>
    %cst_54 = arith.constant 1.000000e+00 : f32
    %163 = vector.broadcast %cst_54 : f32 to vector<16x64xf32>
    %164 = arith.addf %163, %162 : vector<16x64xf32>
    %165 = arith.mulf %126, %164 : vector<16x64xf32>
    %c0_55 = arith.constant 0 : index
    %c0_56 = arith.constant 0 : index
    %c0_57 = arith.constant 0 : index
    %166 = vector.load %arg4[%c0_55, %c0_56, %c0_57] : memref<2x64x32xf32, #tpu.memory_space<vmem>>, vector<1x64x32xf32>
    %167 = vector.shape_cast %166 : vector<1x64x32xf32> to vector<64x32xf32>
    %cst_58 = arith.constant dense<0.000000e+00> : vector<16x32xf32>
    %168 = tpu.matmul %165, %167, %cst_58 {dimension_numbers = #tpu.dot_dimension_numbers<[1], [0], [0], [1], [0, 0, 1, 1], [], []>} : vector<16x64xf32>, vector<64x32xf32>, vector<16x32xf32> -> vector<16x32xf32>
    %169 = vector.extract_strided_slice %30 {offsets = [6, 0], sizes = [1, 32], strides = [1, 1]} : vector<9x32xf32> to vector<1x32xf32>
    %170 = vector.broadcast %169 : vector<1x32xf32> to vector<16x32xf32>
    %171 = arith.addf %168, %170 : vector<16x32xf32>
    %172 = arith.addf %117, %171 : vector<16x32xf32>
    %173 = vector.extract_strided_slice %30 {offsets = [7, 0], sizes = [1, 32], strides = [1, 1]} : vector<9x32xf32> to vector<1x32xf32>
    %174 = vector.extract_strided_slice %30 {offsets = [8, 0], sizes = [1, 32], strides = [1, 1]} : vector<9x32xf32> to vector<1x32xf32>
    %cst_59 = arith.constant dense<0.000000e+00> : vector<16xf32>
    %175 = vector.multi_reduction <add>, %172, %cst_59 [1] : vector<16x32xf32> to vector<16xf32>
    %176 = vector.shape_cast %175 : vector<16xf32> to vector<16x1xf32>
    %cst_60 = arith.constant 3.200000e+01 : f32
    %177 = vector.broadcast %cst_60 : f32 to vector<16x1xf32>
    %178 = arith.divf %176, %177 : vector<16x1xf32>
    %179 = vector.broadcast %178 : vector<16x1xf32> to vector<16x32xf32>
    %180 = arith.subf %172, %179 : vector<16x32xf32>
    %181 = arith.mulf %180, %180 : vector<16x32xf32>
    %cst_61 = arith.constant dense<0.000000e+00> : vector<16xf32>
    %182 = vector.multi_reduction <add>, %181, %cst_61 [1] : vector<16x32xf32> to vector<16xf32>
    %183 = vector.shape_cast %182 : vector<16xf32> to vector<16x1xf32>
    %cst_62 = arith.constant 3.200000e+01 : f32
    %184 = vector.broadcast %cst_62 : f32 to vector<16x1xf32>
    %185 = arith.divf %183, %184 : vector<16x1xf32>
    %186 = vector.broadcast %178 : vector<16x1xf32> to vector<16x32xf32>
    %187 = arith.subf %172, %186 : vector<16x32xf32>
    %cst_63 = arith.constant 9.99999996E-13 : f32
    %188 = vector.broadcast %cst_63 : f32 to vector<16x1xf32>
    %189 = arith.addf %185, %188 : vector<16x1xf32>
    %190 = math.rsqrt %189 : vector<16x1xf32>
    %191 = vector.broadcast %190 : vector<16x1xf32> to vector<16x32xf32>
    %192 = arith.mulf %187, %191 : vector<16x32xf32>
    %193 = vector.broadcast %173 : vector<1x32xf32> to vector<16x32xf32>
    %194 = arith.mulf %192, %193 : vector<16x32xf32>
    %195 = vector.broadcast %174 : vector<1x32xf32> to vector<16x32xf32>
    %196 = arith.addf %194, %195 : vector<16x32xf32>
    %c1 = arith.constant 1 : index
    %c0_64 = arith.constant 0 : index
    %c0_65 = arith.constant 0 : index
    %197 = vector.load %arg2[%c1, %c0_64, %c0_65] : memref<2x32x128xf32, #tpu.memory_space<vmem>>, vector<1x32x128xf32>
    %198 = vector.shape_cast %197 : vector<1x32x128xf32> to vector<32x128xf32>
    %c1_66 = arith.constant 1 : index
    %c0_67 = arith.constant 0 : index
    %c0_68 = arith.constant 0 : index
    %199 = vector.load %arg5[%c1_66, %c0_67, %c0_68] : memref<2x9x32xf32, #tpu.memory_space<vmem>>, vector<1x9x32xf32>
    %200 = vector.shape_cast %199 : vector<1x9x32xf32> to vector<9x32xf32>
    %201 = vector.extract_strided_slice %198 {offsets = [0, 0], sizes = [32, 96], strides = [1, 1]} : vector<32x128xf32> to vector<32x96xf32>
    %cst_69 = arith.constant dense<0.000000e+00> : vector<16x96xf32>
    %202 = tpu.matmul %196, %201, %cst_69 {dimension_numbers = #tpu.dot_dimension_numbers<[1], [0], [0], [1], [0, 0, 1, 1], [], []>} : vector<16x32xf32>, vector<32x96xf32>, vector<16x96xf32> -> vector<16x96xf32>
    %203 = vector.extract_strided_slice %202 {offsets = [0, 0], sizes = [16, 32], strides = [1, 1]} : vector<16x96xf32> to vector<16x32xf32>
    %204 = vector.extract_strided_slice %200 {offsets = [0, 0], sizes = [1, 32], strides = [1, 1]} : vector<9x32xf32> to vector<1x32xf32>
    %205 = vector.broadcast %204 : vector<1x32xf32> to vector<16x32xf32>
    %206 = arith.addf %203, %205 : vector<16x32xf32>
    %cst_70 = arith.constant 2.500000e-01 : f32
    %207 = vector.broadcast %cst_70 : f32 to vector<16x32xf32>
    %208 = arith.mulf %206, %207 : vector<16x32xf32>
    %209 = vector.extract_strided_slice %202 {offsets = [0, 32], sizes = [16, 32], strides = [1, 1]} : vector<16x96xf32> to vector<16x32xf32>
    %210 = vector.extract_strided_slice %200 {offsets = [1, 0], sizes = [1, 32], strides = [1, 1]} : vector<9x32xf32> to vector<1x32xf32>
    %211 = vector.broadcast %210 : vector<1x32xf32> to vector<16x32xf32>
    %212 = arith.addf %209, %211 : vector<16x32xf32>
    %213 = vector.extract_strided_slice %202 {offsets = [0, 64], sizes = [16, 32], strides = [1, 1]} : vector<16x96xf32> to vector<16x32xf32>
    %214 = vector.extract_strided_slice %200 {offsets = [2, 0], sizes = [1, 32], strides = [1, 1]} : vector<9x32xf32> to vector<1x32xf32>
    %215 = vector.broadcast %214 : vector<1x32xf32> to vector<16x32xf32>
    %216 = arith.addf %213, %215 : vector<16x32xf32>
    %217 = vector.extract_strided_slice %198 {offsets = [0, 96], sizes = [32, 32], strides = [1, 1]} : vector<32x128xf32> to vector<32x32xf32>
    %218 = vector.shape_cast %208 : vector<16x32xf32> to vector<2x8x32xf32>
    %219 = vector.shape_cast %212 : vector<16x32xf32> to vector<2x8x32xf32>
    %220 = vector.shape_cast %216 : vector<16x32xf32> to vector<2x8x32xf32>
    %cst_71 = arith.constant 0.000000e+00 : f32
    %221 = vector.broadcast %cst_71 : f32 to vector<16x32xf32>
    %222 = vector.extract_strided_slice %218 {offsets = [0, 0, 0], sizes = [2, 8, 16], strides = [1, 1, 1]} : vector<2x8x32xf32> to vector<2x8x16xf32>
    %223 = vector.extract_strided_slice %219 {offsets = [0, 0, 0], sizes = [2, 8, 16], strides = [1, 1, 1]} : vector<2x8x32xf32> to vector<2x8x16xf32>
    "tpu.trace_start"() <{level = 10 : i32, message = "bqd,bkd->bqk"}> : () -> ()
    %cst_72 = arith.constant dense<0.000000e+00> : vector<2x8x8xf32>
    %224 = tpu.matmul %222, %223, %cst_72 {dimension_numbers = #tpu.dot_dimension_numbers<[2], [2], [1], [1], [0, 0, 0, 1, 1, 1], [0], [0]>} : vector<2x8x16xf32>, vector<2x8x16xf32>, vector<2x8x8xf32> -> vector<2x8x8xf32>
    "tpu.trace_stop"() : () -> ()
    %cst_73 = arith.constant dense<0xFF800000> : vector<2x8xf32>
    %225 = vector.multi_reduction <maximumf>, %224, %cst_73 [2] : vector<2x8x8xf32> to vector<2x8xf32>
    %226 = vector.shape_cast %225 : vector<2x8xf32> to vector<2x8x1xf32>
    %227 = vector.broadcast %226 : vector<2x8x1xf32> to vector<2x8x8xf32>
    %228 = arith.subf %224, %227 : vector<2x8x8xf32>
    %229 = math.exp %228 : vector<2x8x8xf32>
    %cst_74 = arith.constant dense<0.000000e+00> : vector<2x8xf32>
    %230 = vector.multi_reduction <add>, %229, %cst_74 [2] : vector<2x8x8xf32> to vector<2x8xf32>
    %231 = vector.shape_cast %230 : vector<2x8xf32> to vector<2x8x1xf32>
    %232 = tpu.reciprocal %231 {approx = true} : vector<2x8x1xf32> -> vector<2x8x1xf32>
    %233 = vector.broadcast %232 : vector<2x8x1xf32> to vector<2x8x8xf32>
    %234 = arith.mulf %229, %233 : vector<2x8x8xf32>
    %235 = vector.extract_strided_slice %220 {offsets = [0, 0, 0], sizes = [2, 8, 16], strides = [1, 1, 1]} : vector<2x8x32xf32> to vector<2x8x16xf32>
    "tpu.trace_start"() <{level = 10 : i32, message = "bqk,bkd->bqd"}> : () -> ()
    %cst_75 = arith.constant dense<0.000000e+00> : vector<2x8x16xf32>
    %236 = tpu.matmul %234, %235, %cst_75 {dimension_numbers = #tpu.dot_dimension_numbers<[2], [1], [1], [2], [0, 0, 0, 1, 1, 2], [0], [0]>} : vector<2x8x8xf32>, vector<2x8x16xf32>, vector<2x8x16xf32> -> vector<2x8x16xf32>
    "tpu.trace_stop"() : () -> ()
    %237 = vector.shape_cast %236 : vector<2x8x16xf32> to vector<16x16xf32>
    %238 = vector.extract_strided_slice %217 {offsets = [0, 0], sizes = [16, 32], strides = [1, 1]} : vector<32x32xf32> to vector<16x32xf32>
    %cst_76 = arith.constant dense<0.000000e+00> : vector<16x32xf32>
    %239 = tpu.matmul %237, %238, %cst_76 {dimension_numbers = #tpu.dot_dimension_numbers<[1], [0], [0], [1], [0, 0, 1, 1], [], []>} : vector<16x16xf32>, vector<16x32xf32>, vector<16x32xf32> -> vector<16x32xf32>
    %240 = arith.addf %221, %239 : vector<16x32xf32>
    %241 = vector.extract_strided_slice %218 {offsets = [0, 0, 16], sizes = [2, 8, 16], strides = [1, 1, 1]} : vector<2x8x32xf32> to vector<2x8x16xf32>
    %242 = vector.extract_strided_slice %219 {offsets = [0, 0, 16], sizes = [2, 8, 16], strides = [1, 1, 1]} : vector<2x8x32xf32> to vector<2x8x16xf32>
    "tpu.trace_start"() <{level = 10 : i32, message = "bqd,bkd->bqk"}> : () -> ()
    %cst_77 = arith.constant dense<0.000000e+00> : vector<2x8x8xf32>
    %243 = tpu.matmul %241, %242, %cst_77 {dimension_numbers = #tpu.dot_dimension_numbers<[2], [2], [1], [1], [0, 0, 0, 1, 1, 1], [0], [0]>} : vector<2x8x16xf32>, vector<2x8x16xf32>, vector<2x8x8xf32> -> vector<2x8x8xf32>
    "tpu.trace_stop"() : () -> ()
    %cst_78 = arith.constant dense<0xFF800000> : vector<2x8xf32>
    %244 = vector.multi_reduction <maximumf>, %243, %cst_78 [2] : vector<2x8x8xf32> to vector<2x8xf32>
    %245 = vector.shape_cast %244 : vector<2x8xf32> to vector<2x8x1xf32>
    %246 = vector.broadcast %245 : vector<2x8x1xf32> to vector<2x8x8xf32>
    %247 = arith.subf %243, %246 : vector<2x8x8xf32>
    %248 = math.exp %247 : vector<2x8x8xf32>
    %cst_79 = arith.constant dense<0.000000e+00> : vector<2x8xf32>
    %249 = vector.multi_reduction <add>, %248, %cst_79 [2] : vector<2x8x8xf32> to vector<2x8xf32>
    %250 = vector.shape_cast %249 : vector<2x8xf32> to vector<2x8x1xf32>
    %251 = tpu.reciprocal %250 {approx = true} : vector<2x8x1xf32> -> vector<2x8x1xf32>
    %252 = vector.broadcast %251 : vector<2x8x1xf32> to vector<2x8x8xf32>
    %253 = arith.mulf %248, %252 : vector<2x8x8xf32>
    %254 = vector.extract_strided_slice %220 {offsets = [0, 0, 16], sizes = [2, 8, 16], strides = [1, 1, 1]} : vector<2x8x32xf32> to vector<2x8x16xf32>
    "tpu.trace_start"() <{level = 10 : i32, message = "bqk,bkd->bqd"}> : () -> ()
    %cst_80 = arith.constant dense<0.000000e+00> : vector<2x8x16xf32>
    %255 = tpu.matmul %253, %254, %cst_80 {dimension_numbers = #tpu.dot_dimension_numbers<[2], [1], [1], [2], [0, 0, 0, 1, 1, 2], [0], [0]>} : vector<2x8x8xf32>, vector<2x8x16xf32>, vector<2x8x16xf32> -> vector<2x8x16xf32>
    "tpu.trace_stop"() : () -> ()
    %256 = vector.shape_cast %255 : vector<2x8x16xf32> to vector<16x16xf32>
    %257 = vector.extract_strided_slice %217 {offsets = [16, 0], sizes = [16, 32], strides = [1, 1]} : vector<32x32xf32> to vector<16x32xf32>
    %cst_81 = arith.constant dense<0.000000e+00> : vector<16x32xf32>
    %258 = tpu.matmul %256, %257, %cst_81 {dimension_numbers = #tpu.dot_dimension_numbers<[1], [0], [0], [1], [0, 0, 1, 1], [], []>} : vector<16x16xf32>, vector<16x32xf32>, vector<16x32xf32> -> vector<16x32xf32>
    %259 = arith.addf %240, %258 : vector<16x32xf32>
    %260 = vector.extract_strided_slice %200 {offsets = [3, 0], sizes = [1, 32], strides = [1, 1]} : vector<9x32xf32> to vector<1x32xf32>
    %261 = vector.broadcast %260 : vector<1x32xf32> to vector<16x32xf32>
    %262 = arith.addf %259, %261 : vector<16x32xf32>
    %263 = arith.addf %196, %262 : vector<16x32xf32>
    %264 = vector.extract_strided_slice %200 {offsets = [4, 0], sizes = [1, 32], strides = [1, 1]} : vector<9x32xf32> to vector<1x32xf32>
    %265 = vector.extract_strided_slice %200 {offsets = [5, 0], sizes = [1, 32], strides = [1, 1]} : vector<9x32xf32> to vector<1x32xf32>
    %cst_82 = arith.constant dense<0.000000e+00> : vector<16xf32>
    %266 = vector.multi_reduction <add>, %263, %cst_82 [1] : vector<16x32xf32> to vector<16xf32>
    %267 = vector.shape_cast %266 : vector<16xf32> to vector<16x1xf32>
    %cst_83 = arith.constant 3.200000e+01 : f32
    %268 = vector.broadcast %cst_83 : f32 to vector<16x1xf32>
    %269 = arith.divf %267, %268 : vector<16x1xf32>
    %270 = vector.broadcast %269 : vector<16x1xf32> to vector<16x32xf32>
    %271 = arith.subf %263, %270 : vector<16x32xf32>
    %272 = arith.mulf %271, %271 : vector<16x32xf32>
    %cst_84 = arith.constant dense<0.000000e+00> : vector<16xf32>
    %273 = vector.multi_reduction <add>, %272, %cst_84 [1] : vector<16x32xf32> to vector<16xf32>
    %274 = vector.shape_cast %273 : vector<16xf32> to vector<16x1xf32>
    %cst_85 = arith.constant 3.200000e+01 : f32
    %275 = vector.broadcast %cst_85 : f32 to vector<16x1xf32>
    %276 = arith.divf %274, %275 : vector<16x1xf32>
    %277 = vector.broadcast %269 : vector<16x1xf32> to vector<16x32xf32>
    %278 = arith.subf %263, %277 : vector<16x32xf32>
    %cst_86 = arith.constant 9.99999996E-13 : f32
    %279 = vector.broadcast %cst_86 : f32 to vector<16x1xf32>
    %280 = arith.addf %276, %279 : vector<16x1xf32>
    %281 = math.rsqrt %280 : vector<16x1xf32>
    %282 = vector.broadcast %281 : vector<16x1xf32> to vector<16x32xf32>
    %283 = arith.mulf %278, %282 : vector<16x32xf32>
    %284 = vector.broadcast %264 : vector<1x32xf32> to vector<16x32xf32>
    %285 = arith.mulf %283, %284 : vector<16x32xf32>
    %286 = vector.broadcast %265 : vector<1x32xf32> to vector<16x32xf32>
    %287 = arith.addf %285, %286 : vector<16x32xf32>
    %c1_87 = arith.constant 1 : index
    %c0_88 = arith.constant 0 : index
    %c0_89 = arith.constant 0 : index
    %288 = vector.load %arg3[%c1_87, %c0_88, %c0_89] : memref<2x32x64xf32, #tpu.memory_space<vmem>>, vector<1x32x64xf32>
    %289 = vector.shape_cast %288 : vector<1x32x64xf32> to vector<32x64xf32>
    %cst_90 = arith.constant dense<0.000000e+00> : vector<16x64xf32>
    %290 = tpu.matmul %287, %289, %cst_90 {dimension_numbers = #tpu.dot_dimension_numbers<[1], [0], [0], [1], [0, 0, 1, 1], [], []>} : vector<16x32xf32>, vector<32x64xf32>, vector<16x64xf32> -> vector<16x64xf32>
    %c1_91 = arith.constant 1 : index
    %c0_92 = arith.constant 0 : index
    %c0_93 = arith.constant 0 : index
    %291 = vector.load %arg6[%c1_91, %c0_92, %c0_93] : memref<2x1x64xf32, #tpu.memory_space<vmem>>, vector<1x1x64xf32>
    %292 = vector.shape_cast %291 : vector<1x1x64xf32> to vector<1x64xf32>
    %293 = vector.broadcast %292 : vector<1x64xf32> to vector<16x64xf32>
    %294 = arith.addf %290, %293 : vector<16x64xf32>
    %cst_94 = arith.constant 5.000000e-01 : f32
    %295 = vector.broadcast %cst_94 : f32 to vector<16x64xf32>
    %296 = arith.mulf %295, %294 : vector<16x64xf32>
    %cst_95 = arith.constant 0.707106769 : f32
    %297 = vector.broadcast %cst_95 : f32 to vector<16x64xf32>
    %298 = arith.mulf %294, %297 : vector<16x64xf32>
    %cst_96 = arith.constant 0.000000e+00 : f32
    %299 = vector.broadcast %cst_96 : f32 to vector<16x64xf32>
    %300 = arith.cmpf oge, %298, %299 : vector<16x64xf32>
    %cst_97 = arith.constant 1.000000e+00 : f32
    %cst_98 = arith.constant -1.000000e+00 : f32
    %301 = vector.broadcast %cst_97 : f32 to vector<16x64xf32>
    %302 = vector.broadcast %cst_98 : f32 to vector<16x64xf32>
    %303 = arith.select %300, %301, %302 : vector<16x64xi1>, vector<16x64xf32>
    %304 = math.absf %298 : vector<16x64xf32>
    %cst_99 = arith.constant 0.327591091 : f32
    %305 = vector.broadcast %cst_99 : f32 to vector<16x64xf32>
    %306 = arith.mulf %305, %304 : vector<16x64xf32>
    %cst_100 = arith.constant 1.000000e+00 : f32
    %307 = vector.broadcast %cst_100 : f32 to vector<16x64xf32>
    %308 = arith.addf %307, %306 : vector<16x64xf32>
    %cst_101 = arith.constant 1.000000e+00 : f32
    %309 = vector.broadcast %cst_101 : f32 to vector<16x64xf32>
    %310 = arith.divf %309, %308 : vector<16x64xf32>
    %cst_102 = arith.constant 1.06140542 : f32
    %311 = vector.broadcast %cst_102 : f32 to vector<16x64xf32>
    %312 = arith.mulf %311, %310 : vector<16x64xf32>
    %cst_103 = arith.constant -1.45315206 : f32
    %313 = vector.broadcast %cst_103 : f32 to vector<16x64xf32>
    %314 = arith.addf %312, %313 : vector<16x64xf32>
    %315 = arith.mulf %314, %310 : vector<16x64xf32>
    %cst_104 = arith.constant 1.42141378 : f32
    %316 = vector.broadcast %cst_104 : f32 to vector<16x64xf32>
    %317 = arith.addf %315, %316 : vector<16x64xf32>
    %318 = arith.mulf %317, %310 : vector<16x64xf32>
    %cst_105 = arith.constant -0.284496725 : f32
    %319 = vector.broadcast %cst_105 : f32 to vector<16x64xf32>
    %320 = arith.addf %318, %319 : vector<16x64xf32>
    %321 = arith.mulf %320, %310 : vector<16x64xf32>
    %cst_106 = arith.constant 0.254829586 : f32
    %322 = vector.broadcast %cst_106 : f32 to vector<16x64xf32>
    %323 = arith.addf %321, %322 : vector<16x64xf32>
    %324 = arith.mulf %323, %310 : vector<16x64xf32>
    %cst_107 = arith.constant 0.000000e+00 : f32
    %325 = vector.broadcast %cst_107 : f32 to vector<16x64xf32>
    %326 = arith.subf %325, %304 : vector<16x64xf32>
    %327 = arith.mulf %326, %304 : vector<16x64xf32>
    %328 = math.exp %327 : vector<16x64xf32>
    %329 = arith.mulf %324, %328 : vector<16x64xf32>
    %cst_108 = arith.constant 1.000000e+00 : f32
    %330 = vector.broadcast %cst_108 : f32 to vector<16x64xf32>
    %331 = arith.subf %330, %329 : vector<16x64xf32>
    %332 = arith.mulf %303, %331 : vector<16x64xf32>
    %cst_109 = arith.constant 1.000000e+00 : f32
    %333 = vector.broadcast %cst_109 : f32 to vector<16x64xf32>
    %334 = arith.addf %333, %332 : vector<16x64xf32>
    %335 = arith.mulf %296, %334 : vector<16x64xf32>
    %c1_110 = arith.constant 1 : index
    %c0_111 = arith.constant 0 : index
    %c0_112 = arith.constant 0 : index
    %336 = vector.load %arg4[%c1_110, %c0_111, %c0_112] : memref<2x64x32xf32, #tpu.memory_space<vmem>>, vector<1x64x32xf32>
    %337 = vector.shape_cast %336 : vector<1x64x32xf32> to vector<64x32xf32>
    %cst_113 = arith.constant dense<0.000000e+00> : vector<16x32xf32>
    %338 = tpu.matmul %335, %337, %cst_113 {dimension_numbers = #tpu.dot_dimension_numbers<[1], [0], [0], [1], [0, 0, 1, 1], [], []>} : vector<16x64xf32>, vector<64x32xf32>, vector<16x32xf32> -> vector<16x32xf32>
    %339 = vector.extract_strided_slice %200 {offsets = [6, 0], sizes = [1, 32], strides = [1, 1]} : vector<9x32xf32> to vector<1x32xf32>
    %340 = vector.broadcast %339 : vector<1x32xf32> to vector<16x32xf32>
    %341 = arith.addf %338, %340 : vector<16x32xf32>
    %342 = arith.addf %287, %341 : vector<16x32xf32>
    %343 = vector.extract_strided_slice %200 {offsets = [7, 0], sizes = [1, 32], strides = [1, 1]} : vector<9x32xf32> to vector<1x32xf32>
    %344 = vector.extract_strided_slice %200 {offsets = [8, 0], sizes = [1, 32], strides = [1, 1]} : vector<9x32xf32> to vector<1x32xf32>
    %cst_114 = arith.constant dense<0.000000e+00> : vector<16xf32>
    %345 = vector.multi_reduction <add>, %342, %cst_114 [1] : vector<16x32xf32> to vector<16xf32>
    %346 = vector.shape_cast %345 : vector<16xf32> to vector<16x1xf32>
    %cst_115 = arith.constant 3.200000e+01 : f32
    %347 = vector.broadcast %cst_115 : f32 to vector<16x1xf32>
    %348 = arith.divf %346, %347 : vector<16x1xf32>
    %349 = vector.broadcast %348 : vector<16x1xf32> to vector<16x32xf32>
    %350 = arith.subf %342, %349 : vector<16x32xf32>
    %351 = arith.mulf %350, %350 : vector<16x32xf32>
    %cst_116 = arith.constant dense<0.000000e+00> : vector<16xf32>
    %352 = vector.multi_reduction <add>, %351, %cst_116 [1] : vector<16x32xf32> to vector<16xf32>
    %353 = vector.shape_cast %352 : vector<16xf32> to vector<16x1xf32>
    %cst_117 = arith.constant 3.200000e+01 : f32
    %354 = vector.broadcast %cst_117 : f32 to vector<16x1xf32>
    %355 = arith.divf %353, %354 : vector<16x1xf32>
    %356 = vector.broadcast %348 : vector<16x1xf32> to vector<16x32xf32>
    %357 = arith.subf %342, %356 : vector<16x32xf32>
    %cst_118 = arith.constant 9.99999996E-13 : f32
    %358 = vector.broadcast %cst_118 : f32 to vector<16x1xf32>
    %359 = arith.addf %355, %358 : vector<16x1xf32>
    %360 = math.rsqrt %359 : vector<16x1xf32>
    %361 = vector.broadcast %360 : vector<16x1xf32> to vector<16x32xf32>
    %362 = arith.mulf %357, %361 : vector<16x32xf32>
    %363 = vector.broadcast %343 : vector<1x32xf32> to vector<16x32xf32>
    %364 = arith.mulf %362, %363 : vector<16x32xf32>
    %365 = vector.broadcast %344 : vector<1x32xf32> to vector<16x32xf32>
    %366 = arith.addf %364, %365 : vector<16x32xf32>
    %367 = vector.shape_cast %366 : vector<16x32xf32> to vector<2x8x32xf32>
    %368 = vector.extract_strided_slice %367 {offsets = [0, 0, 0], sizes = [2, 1, 32], strides = [1, 1, 1]} : vector<2x8x32xf32> to vector<2x1x32xf32>
    %369 = vector.shape_cast %368 : vector<2x1x32xf32> to vector<2x32xf32>
    %c0_119 = arith.constant 0 : index
    %c0_120 = arith.constant 0 : index
    %370 = vector.load %arg7[%c0_119, %c0_120] : memref<32x32xf32, #tpu.memory_space<vmem>>, vector<32x32xf32>
    %cst_121 = arith.constant dense<0.000000e+00> : vector<2x32xf32>
    %371 = tpu.matmul %369, %370, %cst_121 {dimension_numbers = #tpu.dot_dimension_numbers<[1], [0], [0], [1], [0, 0, 1, 1], [], []>} : vector<2x32xf32>, vector<32x32xf32>, vector<2x32xf32> -> vector<2x32xf32>
    %c0_122 = arith.constant 0 : index
    %c0_123 = arith.constant 0 : index
    %372 = vector.load %arg8[%c0_122, %c0_123] : memref<1x32xf32, #tpu.memory_space<vmem>>, vector<1x32xf32>
    %373 = vector.broadcast %372 : vector<1x32xf32> to vector<2x32xf32>
    %374 = arith.addf %371, %373 : vector<2x32xf32>
    %375 = math.tanh %374 : vector<2x32xf32>
    %c0_124 = arith.constant 0 : index
    %c0_125 = arith.constant 0 : index
    %376 = vector.load %arg9[%c0_124, %c0_125] : memref<32x128xf32, #tpu.memory_space<vmem>>, vector<32x128xf32>
    %cst_126 = arith.constant dense<0.000000e+00> : vector<2x128xf32>
    %377 = tpu.matmul %375, %376, %cst_126 {dimension_numbers = #tpu.dot_dimension_numbers<[1], [0], [0], [1], [0, 0, 1, 1], [], []>} : vector<2x32xf32>, vector<32x128xf32>, vector<2x128xf32> -> vector<2x128xf32>
    %c0_127 = arith.constant 0 : index
    %c0_128 = arith.constant 0 : index
    %378 = vector.load %arg10[%c0_127, %c0_128] : memref<1x128xf32, #tpu.memory_space<vmem>>, vector<1x128xf32>
    %379 = vector.broadcast %378 : vector<1x128xf32> to vector<2x128xf32>
    %380 = arith.addf %377, %379 : vector<2x128xf32>
    %c0_129 = arith.constant 0 : index
    %c0_130 = arith.constant 0 : index
    %381 = vector.load %arg11[%c0_129, %c0_130] : memref<2x128xf32, #tpu.memory_space<vmem>>, vector<2x128xf32>
    tpu.vector_store %arg11[%c0_129, %c0_130], %380 {strides = array<i32>} : memref<2x128xf32, #tpu.memory_space<vmem>>, vector<2x128xf32>,
    return
  }
}

</mosaic_0001>

<llo_original>
// kernel: tpu_custom_call.1
$region0: #{tpu_custom_call.1}
  #allocation0 [shape = 'u32[]', space=smem, size = 0x4, offset = 0x4, fixed_abs, tag = 'smem constant byte address 0x4 - core index']
  #allocation1 [shape = 'u32[72,128]{1,0:T(1,128)}', space=vmem, size = 0x9000, scoped, tag = 'internal scratch']
  %s0 = inlined_call_operand.vmem [shape: f32[2,8,32], index: 0, kind: input, shape index: {}]
  %s1 = inlined_call_operand.vmem [shape: f32[2,32], index: 1, kind: input, shape index: {}]
  %s2 = inlined_call_operand.vmem [shape: f32[2,32,128], index: 2, kind: input, shape index: {}]
  %s3 = inlined_call_operand.vmem [shape: f32[2,32,64], index: 3, kind: input, shape index: {}]
  %s4 = inlined_call_operand.vmem [shape: f32[2,64,32], index: 4, kind: input, shape index: {}]
  %s5 = inlined_call_operand.vmem [shape: f32[2,9,32], index: 5, kind: input, shape index: {}]
  %s6 = inlined_call_operand.vmem [shape: f32[2,1,64], index: 6, kind: input, shape index: {}]
  %s7 = inlined_call_operand.vmem [shape: f32[32,32], index: 7, kind: input, shape index: {}]
  %s8 = inlined_call_operand.vmem [shape: f32[1,32], index: 8, kind: input, shape index: {}]
  %s9 = inlined_call_operand.vmem [shape: f32[32,128], index: 9, kind: input, shape index: {}]
  %s10 = inlined_call_operand.vmem [shape: f32[1,128], index: 10, kind: input, shape index: {}]
  %s11 = inlined_call_operand.hbm [shape: f32[2,128], index: 11, kind: output, shape index: {}]
  %s12 = sld [smem:[#allocation0]]
  $region54: #{tpu_custom_call.1} parent=0
    _
  %s14 = ssub.s32 1, %s12
  %s15 = scalar_select 0, %s14, %s12
  $region1: #{tpu_custom_call.1} parent=0
    #allocation2 [shape = 'u8[1024]{0}', space=vmem, size = 0x400, scoped, tag = 'output window, operand 0, single buffered']
    #allocation3 [shape = 's32[1]{0}', space=sflag, size = 0x4, scoped, tag = 'scoped memory for tpu_custom_call.1']
    %16 = vsyncpa [#allocation3], 0
    // Predicated region
    $region2: #{tpu_custom_call.1} parent=1 // pred_check
      _
    $region3: #{tpu_custom_call.1} parent=1 // pred_check_branch
      %18 = sbr.rel (0) target = $region5
    $region4: #{tpu_custom_call.1} parent=1 // pred_region
      _
    $region5: #{tpu_custom_call.1} parent=1 // pred_fallthru
      _
    // Predicated region
    $region6: #{tpu_custom_call.1} parent=1 // pred_check
      _
    $region7: #{tpu_custom_call.1} parent=1 // pred_check_branch
      %20 = sbr.rel (0) target = $region9
    $region8: #{tpu_custom_call.1} parent=1 // pred_region
      _
    $region9: #{tpu_custom_call.1} parent=1 // pred_fallthru
      _
    // Predicated region
    $region10: #{tpu_custom_call.1} parent=1 // pred_check
      _
    $region11: #{tpu_custom_call.1} parent=1 // pred_check_branch
      %22 = sbr.rel (0) target = $region13
    $region12: #{tpu_custom_call.1} parent=1 // pred_region
      _
    $region13: #{tpu_custom_call.1} parent=1 // pred_fallthru
      _
    // Predicated region
    $region14: #{tpu_custom_call.1} parent=1 // pred_check
      _
    $region15: #{tpu_custom_call.1} parent=1 // pred_check_branch
      %24 = sbr.rel (0) target = $region17
    $region16: #{tpu_custom_call.1} parent=1 // pred_region
      _
    $region17: #{tpu_custom_call.1} parent=1 // pred_fallthru
      _
    // Predicated region
    $region18: #{tpu_custom_call.1} parent=1 // pred_check
      _
    $region19: #{tpu_custom_call.1} parent=1 // pred_check_branch
      %26 = sbr.rel (0) target = $region21
    $region20: #{tpu_custom_call.1} parent=1 // pred_region
      _
    $region21: #{tpu_custom_call.1} parent=1 // pred_fallthru
      _
    // Predicated region
    $region22: #{tpu_custom_call.1} parent=1 // pred_check
      _
    $region23: #{tpu_custom_call.1} parent=1 // pred_check_branch
      %28 = sbr.rel (0) target = $region25
    $region24: #{tpu_custom_call.1} parent=1 // pred_region
      _
    $region25: #{tpu_custom_call.1} parent=1 // pred_fallthru
      _
    // Predicated region
    $region26: #{tpu_custom_call.1} parent=1 // pred_check
      _
    $region27: #{tpu_custom_call.1} parent=1 // pred_check_branch
      %30 = sbr.rel (0) target = $region29
    $region28: #{tpu_custom_call.1} parent=1 // pred_region
      _
    $region29: #{tpu_custom_call.1} parent=1 // pred_fallthru
      _
    // Predicated region
    $region30: #{tpu_custom_call.1} parent=1 // pred_check
      _
    $region31: #{tpu_custom_call.1} parent=1 // pred_check_branch
      %32 = sbr.rel (0) target = $region33
    $region32: #{tpu_custom_call.1} parent=1 // pred_region
      _
    $region33: #{tpu_custom_call.1} parent=1 // pred_fallthru
      _
    // Predicated region
    $region34: #{tpu_custom_call.1} parent=1 // pred_check
      _
    $region35: #{tpu_custom_call.1} parent=1 // pred_check_branch
      %34 = sbr.rel (0) target = $region37
    $region36: #{tpu_custom_call.1} parent=1 // pred_region
      _
    $region37: #{tpu_custom_call.1} parent=1 // pred_fallthru
      _
    // Predicated region
    $region38: #{tpu_custom_call.1} parent=1 // pred_check
      _
    $region39: #{tpu_custom_call.1} parent=1 // pred_check_branch
      %36 = sbr.rel (0) target = $region41
    $region40: #{tpu_custom_call.1} parent=1 // pred_region
      _
    $region41: #{tpu_custom_call.1} parent=1 // pred_fallthru
      _
    // Predicated region
    $region42: #{tpu_custom_call.1} parent=1 // pred_check
      _
    $region43: #{tpu_custom_call.1} parent=1 // pred_check_branch
      %38 = sbr.rel (0) target = $region45
    $region44: #{tpu_custom_call.1} parent=1 // pred_region
      _
    $region45: #{tpu_custom_call.1} parent=1 // pred_fallthru
      _
    %v39 = vld [vmem:[%s0] sm:$0xff]
    %v40 = vld [vmem:[%s0 + $0x8] sm:$0xff]
    %v41 = vld [vmem:[%s1] sm:$0x3]
    %vm42 = vcmask 261120
    %v43 = vsel %vm42, %v39, 0.0
    %44 = vadd.xlane.f32.xlu0 %v43
    %v45 = vpop.xlane.xlu0 %44
    %v46 = vsel %vm42, %v40, 0.0
    %47 = vadd.xlane.f32.xlu0 %v46
    %v48 = vpop.xlane.xlu0 %47
    %v49 = vrcp.pop 32.0
    %v50 = vmul.f32 32.0, %v49
    %v51 = vsub.f32 1.0, %v50
    %v52 = vmul.f32 %v49, %v51
    %v53 = vadd.f32 %v49, %v52
    %vm54 = vweird.f32 %v49
    %v55 = vsel %vm54, %v49, %v53
    %v56 = vmul.f32 %v45, %v55
    %v57 = vmul.f32 %v48, %v55
    %v58 = vsub.f32 %v39, %v56
    %v59 = vsub.f32 %v40, %v57
    %v60 = vmul.f32 %v58, %v58
    %v61 = vmul.f32 %v59, %v59
    %v62 = vsel %vm42, %v60, 0.0
    %63 = vadd.xlane.f32.xlu0 %v62
    %v64 = vpop.xlane.xlu0 %63
    %v65 = vsel %vm42, %v61, 0.0
    %66 = vadd.xlane.f32.xlu0 %v65
    %v67 = vpop.xlane.xlu0 %66
    %v68 = vmul.f32 %v64, %v55
    %v69 = vmul.f32 %v67, %v55
    %v70 = vadd.f32 %v68, 1e-12
    %v71 = vadd.f32 %v69, 1e-12
    %v72 = vrsqrt.pop %v70
    %v73 = vmul.f32 %v72, %v70
    %v74 = vmul.f32 %v73, %v72
    %v75 = vmul.f32 0.5, %v74
    %v76 = vsub.f32 1.5, %v75
    %v77 = vmul.f32 %v72, %v76
    %vm78 = vweird.f32 %v70
    %vm79 = vweird.f32 %v72
    %vm80 = vmor %vm78, %vm79
    %v81 = vsel %vm80, %v72, %v77
    %v82 = vrsqrt.pop %v71
    %v83 = vmul.f32 %v82, %v71
    %v84 = vmul.f32 %v83, %v82
    %v85 = vmul.f32 0.5, %v84
    %v86 = vsub.f32 1.5, %v85
    %v87 = vmul.f32 %v82, %v86
    %vm88 = vweird.f32 %v71
    %vm89 = vweird.f32 %v82
    %vm90 = vmor %vm88, %vm89
    %v91 = vsel %vm90, %v82, %v87
    %v92 = vmul.f32 %v58, %v81
    %v93 = vmul.f32 %v59, %v91
    %v94 = vperm.slane %v41, 0
    %v95 = vmul.f32 %v92, %v94
    %v96 = vmul.f32 %v93, %v94
    %v97 = vperm.slane %v41, 1
    %v98 = vadd.f32 %v95, %v97
    %v99 = vadd.f32 %v96, %v97
    %v100 = vld [vmem:[%s2] sm:$0xff]
    %v101 = vld [vmem:[%s2 + $0x8] sm:$0xff]
    %v102 = vld [vmem:[%s2 + $0x10] sm:$0xff]
    %v103 = vld [vmem:[%s2 + $0x18] sm:$0xff]
    %v104 = vld [vmem:[%s5] sm:$0xff]
    %v105 = vld [vmem:[%s5 + $0x8] sm:$0x1]
    %v107 = vsel %vm42, %v98, 0
    %v110 = vsel %vm42, %v99, 0
    %112 = vmatpush.msra.mxu0 0.0
    %113 = vmatpush.msra.mxu0 0.0
    %114 = vmatpush.msra.mxu0 0.0
    %115 = vmatpush.msra.mxu0 0.0
    %116 = vmatpush.msra.mxu0 0.0
    %117 = vmatpush.msra.mxu0 0.0
    %118 = vmatpush.msra.mxu0 0.0
    %119 = vmatpush.msra.mxu0 0.0
    %120 = vmatpush.msra.mxu0 0.0
    %121 = vmatpush.msra.mxu0 0.0
    %122 = vmatpush.msra.mxu0 0.0
    %123 = vmatpush.msra.mxu0 0.0
    %124 = vmatpush.msra.mxu0 %v103
    %125 = vmatpush.msra.mxu0 %v102
    %126 = vmatpush.msra.mxu0 %v101
    %127 = vmatpush.msra.mxu0 %v100
    %128 = vmatmul.f32.gmra.mxu0 %v107
    %v129 = vpop.f32.mrf.mxu0
    %v130 = vadd.f32 0.0, %v129
    %131 = vmatmul.f32.gmra.mxu0 %v110
    %v132 = vpop.f32.mrf.mxu0
    %v133 = vadd.f32 0.0, %v132
    %134 = vdwg.mxu0
    %v135 = vperm.slane %v104, 0
    %v136 = vadd.f32 %v130, %v135
    %v137 = vadd.f32 %v133, %v135
    %v138 = vmul.f32 %v136, 0.25
    %v139 = vmul.f32 %v137, 0.25
    %v140 = vperm.slane %v104, 1
    %142 = vrot.lane.b32.xlu0 %v140, 32
    %v143 = vpop.permute.xlu0 %142
    %v145 = vadd.f32 %v130, %v143
    %v146 = vadd.f32 %v133, %v143
    %v147 = vperm.slane %v104, 2
    %149 = vrot.lane.b32.xlu0 %v147, 64
    %v150 = vpop.permute.xlu0 %149
    %v152 = vadd.f32 %v130, %v150
    %v153 = vadd.f32 %v133, %v150
    %155 = vrot.lane.b32.xlu0 %v145, 96
    %v156 = vpop.permute.xlu0 %155
    %vm157 = vcmask 130048
    %v159 = vsel %vm157, %v138, 0
    %v161 = vsel %vm157, %v156, 0
    %163 = vmatpush.xpose.msra.mxu0 0.0
    %164 = vmatpush.xpose.msra.mxu0 0.0
    %165 = vmatpush.xpose.msra.mxu0 0.0
    %166 = vmatpush.xpose.msra.mxu0 0.0
    %167 = vmatpush.xpose.msra.mxu0 0.0
    %168 = vmatpush.xpose.msra.mxu0 0.0
    %169 = vmatpush.xpose.msra.mxu0 0.0
    %170 = vmatpush.xpose.msra.mxu0 0.0
    %171 = vmatpush.xpose.msra.mxu0 0.0
    %172 = vmatpush.xpose.msra.mxu0 0.0
    %173 = vmatpush.xpose.msra.mxu0 0.0
    %174 = vmatpush.xpose.msra.mxu0 0.0
    %175 = vmatpush.xpose.msra.mxu0 0.0
    %176 = vmatpush.xpose.msra.mxu0 0.0
    %177 = vmatpush.xpose.msra.mxu0 0.0
    %178 = vmatpush.xpose.msra.mxu0 %v161
    %179 = vmatmul.f32.gmra.mxu0 %v159
    %v180 = vpop.f32.mrf.mxu0
    %v181 = vadd.f32 0.0, %v180
    %182 = vdwg.mxu0
    %184 = vrot.lane.b32.xlu0 %v146, 96
    %v185 = vpop.permute.xlu0 %184
    %v187 = vsel %vm157, %v139, 0
    %v189 = vsel %vm157, %v185, 0
    %191 = vmatpush.xpose.msra.mxu0 0.0
    %192 = vmatpush.xpose.msra.mxu0 0.0
    %193 = vmatpush.xpose.msra.mxu0 0.0
    %194 = vmatpush.xpose.msra.mxu0 0.0
    %195 = vmatpush.xpose.msra.mxu0 0.0
    %196 = vmatpush.xpose.msra.mxu0 0.0
    %197 = vmatpush.xpose.msra.mxu0 0.0
    %198 = vmatpush.xpose.msra.mxu0 0.0
    %199 = vmatpush.xpose.msra.mxu0 0.0
    %200 = vmatpush.xpose.msra.mxu0 0.0
    %201 = vmatpush.xpose.msra.mxu0 0.0
    %202 = vmatpush.xpose.msra.mxu0 0.0
    %203 = vmatpush.xpose.msra.mxu0 0.0
    %204 = vmatpush.xpose.msra.mxu0 0.0
    %205 = vmatpush.xpose.msra.mxu0 0.0
    %206 = vmatpush.xpose.msra.mxu0 %v189
    %207 = vmatmul.f32.gmra.mxu0 %v187
    %v208 = vpop.f32.mrf.mxu0
    %v209 = vadd.f32 0.0, %v208
    %210 = vdwg.mxu0
    %vm211 = vcmask 64512
    %v212 = vsel %vm211, %v181, -inf
    %213 = vmax.xlane.f32.xlu0 %v212
    %v214 = vpop.xlane.xlu0 %213
    %v215 = vsel %vm211, %v209, -inf
    %216 = vmax.xlane.f32.xlu0 %v215
    %v217 = vpop.xlane.xlu0 %216
    %v218 = vsub.f32 %v181, %v214
    %v219 = vsub.f32 %v209, %v217
    %v220 = vmul.f32 %v218, 1.442695
    %v221 = vpow.pop %v220
    %v222 = vmul.f32 %v219, 1.442695
    %v223 = vpow.pop %v222
    %v224 = vsel %vm211, %v221, 0.0
    %225 = vadd.xlane.f32.xlu0 %v224
    %v226 = vpop.xlane.xlu0 %225
    %v227 = vsel %vm211, %v223, 0.0
    %228 = vadd.xlane.f32.xlu0 %v227
    %v229 = vpop.xlane.xlu0 %228
    %v230 = vrcp.pop %v226
    %v231 = vrcp.pop %v229
    %v232 = vmul.f32 %v221, %v230
    %v233 = vmul.f32 %v223, %v231
    %235 = vrot.lane.b32.xlu0 %v152, 64
    %v236 = vpop.permute.xlu0 %235
    %v239 = vsel %vm211, %v232, 0
    %241 = vmatpush.msra.mxu0 0.0
    %242 = vmatpush.msra.mxu0 0.0
    %243 = vmatpush.msra.mxu0 0.0
    %244 = vmatpush.msra.mxu0 0.0
    %245 = vmatpush.msra.mxu0 0.0
    %246 = vmatpush.msra.mxu0 0.0
    %247 = vmatpush.msra.mxu0 0.0
    %248 = vmatpush.msra.mxu0 0.0
    %249 = vmatpush.msra.mxu0 0.0
    %250 = vmatpush.msra.mxu0 0.0
    %251 = vmatpush.msra.mxu0 0.0
    %252 = vmatpush.msra.mxu0 0.0
    %253 = vmatpush.msra.mxu0 0.0
    %254 = vmatpush.msra.mxu0 0.0
    %255 = vmatpush.msra.mxu0 0.0
    %256 = vmatpush.msra.mxu0 %v236
    %257 = vmatmul.f32.gmra.mxu0 %v239
    %v258 = vpop.f32.mrf.mxu0
    %v259 = vadd.f32 0.0, %v258
    %260 = vdwg.mxu0
    %262 = vrot.lane.b32.xlu0 %v153, 64
    %v263 = vpop.permute.xlu0 %262
    %v266 = vsel %vm211, %v233, 0
    %268 = vmatpush.msra.mxu0 0.0
    %269 = vmatpush.msra.mxu0 0.0
    %270 = vmatpush.msra.mxu0 0.0
    %271 = vmatpush.msra.mxu0 0.0
    %272 = vmatpush.msra.mxu0 0.0
    %273 = vmatpush.msra.mxu0 0.0
    %274 = vmatpush.msra.mxu0 0.0
    %275 = vmatpush.msra.mxu0 0.0
    %276 = vmatpush.msra.mxu0 0.0
    %277 = vmatpush.msra.mxu0 0.0
    %278 = vmatpush.msra.mxu0 0.0
    %279 = vmatpush.msra.mxu0 0.0
    %280 = vmatpush.msra.mxu0 0.0
    %281 = vmatpush.msra.mxu0 0.0
    %282 = vmatpush.msra.mxu0 0.0
    %283 = vmatpush.msra.mxu0 %v263
    %284 = vmatmul.f32.gmra.mxu0 %v266
    %v285 = vpop.f32.mrf.mxu0
    %v286 = vadd.f32 0.0, %v285
    %287 = vdwg.mxu0
    %288 = vrot.lane.b32.xlu0 %v138, 112
    %v289 = vpop.permute.xlu0 %288
    %290 = vrot.lane.b32.xlu0 %v145, 80
    %v291 = vpop.permute.xlu0 %290
    %v292 = vsel %vm157, %v289, 0
    %v294 = vsel %vm157, %v291, 0
    %296 = vmatpush.xpose.msra.mxu0 0.0
    %297 = vmatpush.xpose.msra.mxu0 0.0
    %298 = vmatpush.xpose.msra.mxu0 0.0
    %299 = vmatpush.xpose.msra.mxu0 0.0
    %300 = vmatpush.xpose.msra.mxu0 0.0
    %301 = vmatpush.xpose.msra.mxu0 0.0
    %302 = vmatpush.xpose.msra.mxu0 0.0
    %303 = vmatpush.xpose.msra.mxu0 0.0
    %304 = vmatpush.xpose.msra.mxu0 0.0
    %305 = vmatpush.xpose.msra.mxu0 0.0
    %306 = vmatpush.xpose.msra.mxu0 0.0
    %307 = vmatpush.xpose.msra.mxu0 0.0
    %308 = vmatpush.xpose.msra.mxu0 0.0
    %309 = vmatpush.xpose.msra.mxu0 0.0
    %310 = vmatpush.xpose.msra.mxu0 0.0
    %311 = vmatpush.xpose.msra.mxu0 %v294
    %312 = vmatmul.f32.gmra.mxu0 %v292
    %v313 = vpop.f32.mrf.mxu0
    %v314 = vadd.f32 0.0, %v313
    %315 = vdwg.mxu0
    %316 = vrot.lane.b32.xlu0 %v139, 112
    %v317 = vpop.permute.xlu0 %316
    %318 = vrot.lane.b32.xlu0 %v146, 80
    %v319 = vpop.permute.xlu0 %318
    %v320 = vsel %vm157, %v317, 0
    %v322 = vsel %vm157, %v319, 0
    %324 = vmatpush.xpose.msra.mxu0 0.0
    %325 = vmatpush.xpose.msra.mxu0 0.0
    %326 = vmatpush.xpose.msra.mxu0 0.0
    %327 = vmatpush.xpose.msra.mxu0 0.0
    %328 = vmatpush.xpose.msra.mxu0 0.0
    %329 = vmatpush.xpose.msra.mxu0 0.0
    %330 = vmatpush.xpose.msra.mxu0 0.0
    %331 = vmatpush.xpose.msra.mxu0 0.0
    %332 = vmatpush.xpose.msra.mxu0 0.0
    %333 = vmatpush.xpose.msra.mxu0 0.0
    %334 = vmatpush.xpose.msra.mxu0 0.0
    %335 = vmatpush.xpose.msra.mxu0 0.0
    %336 = vmatpush.xpose.msra.mxu0 0.0
    %337 = vmatpush.xpose.msra.mxu0 0.0
    %338 = vmatpush.xpose.msra.mxu0 0.0
    %339 = vmatpush.xpose.msra.mxu0 %v322
    %340 = vmatmul.f32.gmra.mxu0 %v320
    %v341 = vpop.f32.mrf.mxu0
    %v342 = vadd.f32 0.0, %v341
    %343 = vdwg.mxu0
    %v344 = vsel %vm211, %v314, -inf
    %345 = vmax.xlane.f32.xlu0 %v344
    %v346 = vpop.xlane.xlu0 %345
    %v347 = vsel %vm211, %v342, -inf
    %348 = vmax.xlane.f32.xlu0 %v347
    %v349 = vpop.xlane.xlu0 %348
    %v350 = vsub.f32 %v314, %v346
    %v351 = vsub.f32 %v342, %v349
    %v352 = vmul.f32 %v350, 1.442695
    %v353 = vpow.pop %v352
    %v354 = vmul.f32 %v351, 1.442695
    %v355 = vpow.pop %v354
    %v356 = vsel %vm211, %v353, 0.0
    %357 = vadd.xlane.f32.xlu0 %v356
    %v358 = vpop.xlane.xlu0 %357
    %v359 = vsel %vm211, %v355, 0.0
    %360 = vadd.xlane.f32.xlu0 %v359
    %v361 = vpop.xlane.xlu0 %360
    %v362 = vrcp.pop %v358
    %v363 = vrcp.pop %v361
    %v364 = vmul.f32 %v353, %v362
    %v365 = vmul.f32 %v355, %v363
    %366 = vrot.lane.b32.xlu0 %v152, 48
    %v367 = vpop.permute.xlu0 %366
    %v370 = vsel %vm211, %v364, 0
    %372 = vmatpush.msra.mxu0 0.0
    %373 = vmatpush.msra.mxu0 0.0
    %374 = vmatpush.msra.mxu0 0.0
    %375 = vmatpush.msra.mxu0 0.0
    %376 = vmatpush.msra.mxu0 0.0
    %377 = vmatpush.msra.mxu0 0.0
    %378 = vmatpush.msra.mxu0 0.0
    %379 = vmatpush.msra.mxu0 0.0
    %380 = vmatpush.msra.mxu0 0.0
    %381 = vmatpush.msra.mxu0 0.0
    %382 = vmatpush.msra.mxu0 0.0
    %383 = vmatpush.msra.mxu0 0.0
    %384 = vmatpush.msra.mxu0 0.0
    %385 = vmatpush.msra.mxu0 0.0
    %386 = vmatpush.msra.mxu0 0.0
    %387 = vmatpush.msra.mxu0 %v367
    %388 = vmatmul.f32.gmra.mxu0 %v370
    %v389 = vpop.f32.mrf.mxu0
    %v390 = vadd.f32 0.0, %v389
    %391 = vdwg.mxu0
    %392 = vrot.lane.b32.xlu0 %v153, 48
    %v393 = vpop.permute.xlu0 %392
    %v396 = vsel %vm211, %v365, 0
    %398 = vmatpush.msra.mxu0 0.0
    %399 = vmatpush.msra.mxu0 0.0
    %400 = vmatpush.msra.mxu0 0.0
    %401 = vmatpush.msra.mxu0 0.0
    %402 = vmatpush.msra.mxu0 0.0
    %403 = vmatpush.msra.mxu0 0.0
    %404 = vmatpush.msra.mxu0 0.0
    %405 = vmatpush.msra.mxu0 0.0
    %406 = vmatpush.msra.mxu0 0.0
    %407 = vmatpush.msra.mxu0 0.0
    %408 = vmatpush.msra.mxu0 0.0
    %409 = vmatpush.msra.mxu0 0.0
    %410 = vmatpush.msra.mxu0 0.0
    %411 = vmatpush.msra.mxu0 0.0
    %412 = vmatpush.msra.mxu0 0.0
    %413 = vmatpush.msra.mxu0 %v393
    %414 = vmatmul.f32.gmra.mxu0 %v396
    %v415 = vpop.f32.mrf.mxu0
    %v416 = vadd.f32 0.0, %v415
    %417 = vdwg.mxu0
    %420 = vrot.lane.b32.xlu0 %v102, 32
    %v421 = vpop.permute.xlu0 %420
    %422 = vrot.lane.b32.xlu0 %v103, 32
    %v423 = vpop.permute.xlu0 %422
    %v427 = vsel %vm157, %v390, 0
    %v430 = vsel %vm157, %v416, 0
    %432 = vmatpush.msra.mxu0 0.0
    %433 = vmatpush.msra.mxu0 0.0
    %434 = vmatpush.msra.mxu0 0.0
    %435 = vmatpush.msra.mxu0 0.0
    %436 = vmatpush.msra.mxu0 0.0
    %437 = vmatpush.msra.mxu0 0.0
    %438 = vmatpush.msra.mxu0 0.0
    %439 = vmatpush.msra.mxu0 0.0
    %440 = vmatpush.msra.mxu0 0.0
    %441 = vmatpush.msra.mxu0 0.0
    %442 = vmatpush.msra.mxu0 0.0
    %443 = vmatpush.msra.mxu0 0.0
    %444 = vmatpush.msra.mxu0 0.0
    %445 = vmatpush.msra.mxu0 0.0
    %446 = vmatpush.msra.mxu0 %v423
    %447 = vmatpush.msra.mxu0 %v421
    %448 = vmatmul.f32.gmra.mxu0 %v427
    %v449 = vpop.f32.mrf.mxu0
    %v450 = vadd.f32 0.0, %v449
    %451 = vmatmul.f32.gmra.mxu0 %v430
    %v452 = vpop.f32.mrf.mxu0
    %v453 = vadd.f32 0.0, %v452
    %454 = vdwg.mxu0
    %457 = vrot.lane.b32.xlu0 %v100, 32
    %v458 = vpop.permute.xlu0 %457
    %459 = vrot.lane.b32.xlu0 %v101, 32
    %v460 = vpop.permute.xlu0 %459
    %v464 = vsel %vm157, %v259, 0
    %v467 = vsel %vm157, %v286, 0
    %469 = vmatpush.msra.mxu0 0.0
    %470 = vmatpush.msra.mxu0 0.0
    %471 = vmatpush.msra.mxu0 0.0
    %472 = vmatpush.msra.mxu0 0.0
    %473 = vmatpush.msra.mxu0 0.0
    %474 = vmatpush.msra.mxu0 0.0
    %475 = vmatpush.msra.mxu0 0.0
    %476 = vmatpush.msra.mxu0 0.0
    %477 = vmatpush.msra.mxu0 0.0
    %478 = vmatpush.msra.mxu0 0.0
    %479 = vmatpush.msra.mxu0 0.0
    %480 = vmatpush.msra.mxu0 0.0
    %481 = vmatpush.msra.mxu0 0.0
    %482 = vmatpush.msra.mxu0 0.0
    %483 = vmatpush.msra.mxu0 %v460
    %484 = vmatpush.msra.mxu0 %v458
    %485 = vmatmul.f32.gmra.mxu0 %v464
    %v486 = vpop.f32.mrf.mxu0
    %v487 = vadd.f32 %v450, %v486
    %488 = vmatmul.f32.gmra.mxu0 %v467
    %v489 = vpop.f32.mrf.mxu0
    %v490 = vadd.f32 %v453, %v489
    %491 = vdwg.mxu0
    %v492 = vperm.slane %v104, 3
    %v493 = vadd.f32 %v487, %v492
    %v494 = vadd.f32 %v490, %v492
    %v495 = vadd.f32 %v98, %v493
    %v496 = vadd.f32 %v99, %v494
    %v497 = vsel %vm42, %v495, 0.0
    %498 = vadd.xlane.f32.xlu0 %v497
    %v499 = vpop.xlane.xlu0 %498
    %v500 = vsel %vm42, %v496, 0.0
    %501 = vadd.xlane.f32.xlu0 %v500
    %v502 = vpop.xlane.xlu0 %501
    %v503 = vmul.f32 %v499, %v55
    %v504 = vmul.f32 %v502, %v55
    %v505 = vsub.f32 %v495, %v503
    %v506 = vsub.f32 %v496, %v504
    %v507 = vmul.f32 %v505, %v505
    %v508 = vmul.f32 %v506, %v506
    %v509 = vsel %vm42, %v507, 0.0
    %510 = vadd.xlane.f32.xlu0 %v509
    %v511 = vpop.xlane.xlu0 %510
    %v512 = vsel %vm42, %v508, 0.0
    %513 = vadd.xlane.f32.xlu0 %v512
    %v514 = vpop.xlane.xlu0 %513
    %v515 = vmul.f32 %v511, %v55
    %v516 = vmul.f32 %v514, %v55
    %v517 = vadd.f32 %v515, 1e-12
    %v518 = vadd.f32 %v516, 1e-12
    %v519 = vrsqrt.pop %v517
    %v520 = vmul.f32 %v519, %v517
    %v521 = vmul.f32 %v520, %v519
    %v522 = vmul.f32 0.5, %v521
    %v523 = vsub.f32 1.5, %v522
    %v524 = vmul.f32 %v519, %v523
    %vm525 = vweird.f32 %v517
    %vm526 = vweird.f32 %v519
    %vm527 = vmor %vm525, %vm526
    %v528 = vsel %vm527, %v519, %v524
    %v529 = vrsqrt.pop %v518
    %v530 = vmul.f32 %v529, %v518
    %v531 = vmul.f32 %v530, %v529
    %v532 = vmul.f32 0.5, %v531
    %v533 = vsub.f32 1.5, %v532
    %v534 = vmul.f32 %v529, %v533
    %vm535 = vweird.f32 %v518
    %vm536 = vweird.f32 %v529
    %vm537 = vmor %vm535, %vm536
    %v538 = vsel %vm537, %v529, %v534
    %v539 = vmul.f32 %v505, %v528
    %v540 = vmul.f32 %v506, %v538
    %v541 = vperm.slane %v104, 4
    %v542 = vmul.f32 %v539, %v541
    %v543 = vmul.f32 %v540, %v541
    %v544 = vperm.slane %v104, 5
    %v545 = vadd.f32 %v542, %v544
    %v546 = vadd.f32 %v543, %v544
    %v547 = vld [vmem:[%s3] sm:$0xff]
    %v548 = vld [vmem:[%s3 + $0x8] sm:$0xff]
    %v549 = vld [vmem:[%s3 + $0x10] sm:$0xff]
    %v550 = vld [vmem:[%s3 + $0x18] sm:$0xff]
    %v551 = vld [vmem:[%s6] sm:$0x1]
    %v553 = vperm.slane %v551, 0
    %v556 = vsel %vm42, %v545, 0
    %v559 = vsel %vm42, %v546, 0
    %561 = vmatpush.msra.mxu0 0.0
    %562 = vmatpush.msra.mxu0 0.0
    %563 = vmatpush.msra.mxu0 0.0
    %564 = vmatpush.msra.mxu0 0.0
    %565 = vmatpush.msra.mxu0 0.0
    %566 = vmatpush.msra.mxu0 0.0
    %567 = vmatpush.msra.mxu0 0.0
    %568 = vmatpush.msra.mxu0 0.0
    %569 = vmatpush.msra.mxu0 0.0
    %570 = vmatpush.msra.mxu0 0.0
    %571 = vmatpush.msra.mxu0 0.0
    %572 = vmatpush.msra.mxu0 0.0
    %573 = vmatpush.msra.mxu0 %v550
    %574 = vmatpush.msra.mxu0 %v549
    %575 = vmatpush.msra.mxu0 %v548
    %576 = vmatpush.msra.mxu0 %v547
    %577 = vmatmul.f32.gmra.mxu0 %v556
    %v578 = vpop.f32.mrf.mxu0
    %v579 = vadd.f32 %v553, %v578
    %580 = vmatmul.f32.gmra.mxu0 %v559
    %v581 = vpop.f32.mrf.mxu0
    %v582 = vadd.f32 %v553, %v581
    %583 = vdwg.mxu0
    %v584 = vmul.f32 %v579, 0.5
    %v585 = vmul.f32 %v582, 0.5
    %v586 = vmul.f32 %v579, 0.70710677
    %v587 = vmul.f32 %v582, 0.70710677
    %vm588 = vcmp.ge.f32.partialorder %v586, 0.0
    %vm589 = vcmp.ge.f32.partialorder %v587, 0.0
    %v590 = vsel %vm588, 1.0, -1.0
    %v591 = vsel %vm589, 1.0, -1.0
    %v592 = vand.u32 2147483647, %v586
    %v593 = vand.u32 2147483647, %v587
    %v594 = vmul.f32 %v592, 0.3275911
    %v595 = vmul.f32 %v593, 0.3275911
    %v596 = vadd.f32 %v594, 1.0
    %v597 = vadd.f32 %v595, 1.0
    %v598 = vrcp.pop %v596
    %v599 = vmul.f32 %v596, %v598
    %v600 = vsub.f32 1.0, %v599
    %v601 = vmul.f32 %v598, %v600
    %v602 = vadd.f32 %v598, %v601
    %vm603 = vweird.f32 %v596
    %vm604 = vweird.f32 %v598
    %vm605 = vmor %vm603, %vm604
    %v606 = vsel %vm605, %v598, %v602
    %v607 = vand.u32 2147483647, %v596
    %vm608 = vcmp.eq.f32.partialorder %v607, 8.507059e+37
    %v609 = vand.u32 %v596, 2147483648
    %v610 = vor.u32 1.1754944e-38, %v609
    %v611 = vsel %vm608, %v610, %v606
    %v612 = vmul.f32 1.0, %v611
    %v613 = vrcp.pop %v597
    %v614 = vmul.f32 %v597, %v613
    %v615 = vsub.f32 1.0, %v614
    %v616 = vmul.f32 %v613, %v615
    %v617 = vadd.f32 %v613, %v616
    %vm618 = vweird.f32 %v597
    %vm619 = vweird.f32 %v613
    %vm620 = vmor %vm618, %vm619
    %v621 = vsel %vm620, %v613, %v617
    %v622 = vand.u32 2147483647, %v597
    %vm623 = vcmp.eq.f32.partialorder %v622, 8.507059e+37
    %v624 = vand.u32 %v597, 2147483648
    %v625 = vor.u32 1.1754944e-38, %v624
    %v626 = vsel %vm623, %v625, %v621
    %v627 = vmul.f32 1.0, %v626
    %v628 = vmul.f32 %v612, 1.0614054
    %v629 = vmul.f32 %v627, 1.0614054
    %v630 = vadd.f32 %v628, -1.4531521
    %v631 = vadd.f32 %v629, -1.4531521
    %v632 = vmul.f32 %v630, %v612
    %v633 = vmul.f32 %v631, %v627
    %v634 = vadd.f32 %v632, 1.4214138
    %v635 = vadd.f32 %v633, 1.4214138
    %v636 = vmul.f32 %v634, %v612
    %v637 = vmul.f32 %v635, %v627
    %v638 = vadd.f32 %v636, -0.28449672
    %v639 = vadd.f32 %v637, -0.28449672
    %v640 = vmul.f32 %v638, %v612
    %v641 = vmul.f32 %v639, %v627
    %v642 = vadd.f32 %v640, 0.2548296
    %v643 = vadd.f32 %v641, 0.2548296
    %v644 = vmul.f32 %v642, %v612
    %v645 = vmul.f32 %v643, %v627
    %v646 = vsub.f32 0.0, %v592
    %v647 = vsub.f32 0.0, %v593
    %v648 = vmul.f32 %v646, %v592
    %v649 = vmul.f32 %v647, %v593
    %v650 = vmul.f32 %v648, 1.442695
    %v651 = vpow.pop %v650
    %v652 = vmul.f32 %v649, 1.442695
    %v653 = vpow.pop %v652
    %v654 = vmul.f32 %v644, %v651
    %v655 = vmul.f32 %v645, %v653
    %v656 = vsub.f32 1.0, %v654
    %v657 = vsub.f32 1.0, %v655
    %v658 = vmul.f32 %v590, %v656
    %v659 = vmul.f32 %v591, %v657
    %v660 = vadd.f32 %v658, 1.0
    %v661 = vadd.f32 %v659, 1.0
    %v662 = vmul.f32 %v584, %v660
    %v663 = vmul.f32 %v585, %v661
    %v664 = vld [vmem:[%s4] sm:$0xff]
    %v665 = vld [vmem:[%s4 + $0x8] sm:$0xff]
    %v666 = vld [vmem:[%s4 + $0x10] sm:$0xff]
    %v667 = vld [vmem:[%s4 + $0x18] sm:$0xff]
    %v668 = vld [vmem:[%s4 + $0x20] sm:$0xff]
    %v669 = vld [vmem:[%s4 + $0x28] sm:$0xff]
    %v670 = vld [vmem:[%s4 + $0x30] sm:$0xff]
    %v671 = vld [vmem:[%s4 + $0x38] sm:$0xff]
    %v672 = vperm.slane %v104, 6
    %vm673 = vcmask 523264
    %v675 = vsel %vm673, %v662, 0
    %v678 = vsel %vm673, %v663, 0
    %680 = vmatpush.msra.mxu0 0.0
    %681 = vmatpush.msra.mxu0 0.0
    %682 = vmatpush.msra.mxu0 0.0
    %683 = vmatpush.msra.mxu0 0.0
    %684 = vmatpush.msra.mxu0 0.0
    %685 = vmatpush.msra.mxu0 0.0
    %686 = vmatpush.msra.mxu0 0.0
    %687 = vmatpush.msra.mxu0 0.0
    %688 = vmatpush.msra.mxu0 %v671
    %689 = vmatpush.msra.mxu0 %v670
    %690 = vmatpush.msra.mxu0 %v669
    %691 = vmatpush.msra.mxu0 %v668
    %692 = vmatpush.msra.mxu0 %v667
    %693 = vmatpush.msra.mxu0 %v666
    %694 = vmatpush.msra.mxu0 %v665
    %695 = vmatpush.msra.mxu0 %v664
    %696 = vmatmul.f32.gmra.mxu0 %v675
    %v697 = vpop.f32.mrf.mxu0
    %v698 = vadd.f32 %v672, %v697
    %699 = vmatmul.f32.gmra.mxu0 %v678
    %v700 = vpop.f32.mrf.mxu0
    %v701 = vadd.f32 %v672, %v700
    %702 = vdwg.mxu0
    %v703 = vadd.f32 %v545, %v698
    %v704 = vadd.f32 %v546, %v701
    %v705 = vsel %vm42, %v703, 0.0
    %706 = vadd.xlane.f32.xlu0 %v705
    %v707 = vpop.xlane.xlu0 %706
    %v708 = vsel %vm42, %v704, 0.0
    %709 = vadd.xlane.f32.xlu0 %v708
    %v710 = vpop.xlane.xlu0 %709
    %v711 = vmul.f32 %v707, %v55
    %v712 = vmul.f32 %v710, %v55
    %v713 = vsub.f32 %v703, %v711
    %v714 = vsub.f32 %v704, %v712
    %v715 = vmul.f32 %v713, %v713
    %v716 = vmul.f32 %v714, %v714
    %v717 = vsel %vm42, %v715, 0.0
    %718 = vadd.xlane.f32.xlu0 %v717
    %v719 = vpop.xlane.xlu0 %718
    %v720 = vsel %vm42, %v716, 0.0
    %721 = vadd.xlane.f32.xlu0 %v720
    %v722 = vpop.xlane.xlu0 %721
    %v723 = vmul.f32 %v719, %v55
    %v724 = vmul.f32 %v722, %v55
    %v725 = vadd.f32 %v723, 1e-12
    %v726 = vadd.f32 %v724, 1e-12
    %v727 = vrsqrt.pop %v725
    %v728 = vmul.f32 %v727, %v725
    %v729 = vmul.f32 %v728, %v727
    %v730 = vmul.f32 0.5, %v729
    %v731 = vsub.f32 1.5, %v730
    %v732 = vmul.f32 %v727, %v731
    %vm733 = vweird.f32 %v725
    %vm734 = vweird.f32 %v727
    %vm735 = vmor %vm733, %vm734
    %v736 = vsel %vm735, %v727, %v732
    %v737 = vrsqrt.pop %v726
    %v738 = vmul.f32 %v737, %v726
    %v739 = vmul.f32 %v738, %v737
    %v740 = vmul.f32 0.5, %v739
    %v741 = vsub.f32 1.5, %v740
    %v742 = vmul.f32 %v737, %v741
    %vm743 = vweird.f32 %v726
    %vm744 = vweird.f32 %v737
    %vm745 = vmor %vm743, %vm744
    %v746 = vsel %vm745, %v737, %v742
    %v747 = vmul.f32 %v713, %v736
    %v748 = vmul.f32 %v714, %v746
    %v749 = vperm.slane %v104, 7
    %v750 = vmul.f32 %v747, %v749
    %v751 = vmul.f32 %v748, %v749
    %v752 = vperm.slane %v105, 0
    %v753 = vadd.f32 %v750, %v752
    %v754 = vadd.f32 %v751, %v752
    %s755 = scalar_lea.vmem %s2, 32
    %v756 = vld [vmem:[%s755] sm:$0xff]
    %v757 = vld [vmem:[%s755 + $0x8] sm:$0xff]
    %v758 = vld [vmem:[%s755 + $0x10] sm:$0xff]
    %v759 = vld [vmem:[%s755 + $0x18] sm:$0xff]
    %s760 = scalar_lea.vmem %s5, 16
    %v761 = vld [vmem:[%s760] sm:$0xff]
    %v762 = vld [vmem:[%s760 + $0x8] sm:$0x1]
    %v764 = vsel %vm42, %v753, 0
    %v767 = vsel %vm42, %v754, 0
    %769 = vmatpush.msra.mxu0 0.0
    %770 = vmatpush.msra.mxu0 0.0
    %771 = vmatpush.msra.mxu0 0.0
    %772 = vmatpush.msra.mxu0 0.0
    %773 = vmatpush.msra.mxu0 0.0
    %774 = vmatpush.msra.mxu0 0.0
    %775 = vmatpush.msra.mxu0 0.0
    %776 = vmatpush.msra.mxu0 0.0
    %777 = vmatpush.msra.mxu0 0.0
    %778 = vmatpush.msra.mxu0 0.0
    %779 = vmatpush.msra.mxu0 0.0
    %780 = vmatpush.msra.mxu0 0.0
    %781 = vmatpush.msra.mxu0 %v759
    %782 = vmatpush.msra.mxu0 %v758
    %783 = vmatpush.msra.mxu0 %v757
    %784 = vmatpush.msra.mxu0 %v756
    %785 = vmatmul.f32.gmra.mxu0 %v764
    %v786 = vpop.f32.mrf.mxu0
    %v787 = vadd.f32 0.0, %v786
    %788 = vmatmul.f32.gmra.mxu0 %v767
    %v789 = vpop.f32.mrf.mxu0
    %v790 = vadd.f32 0.0, %v789
    %791 = vdwg.mxu0
    %v792 = vperm.slane %v761, 0
    %v793 = vadd.f32 %v787, %v792
    %v794 = vadd.f32 %v790, %v792
    %v795 = vmul.f32 %v793, 0.25
    %v796 = vmul.f32 %v794, 0.25
    %v797 = vperm.slane %v761, 1
    %799 = vrot.lane.b32.xlu0 %v797, 32
    %v800 = vpop.permute.xlu0 %799
    %v802 = vadd.f32 %v787, %v800
    %v803 = vadd.f32 %v790, %v800
    %v804 = vperm.slane %v761, 2
    %806 = vrot.lane.b32.xlu0 %v804, 64
    %v807 = vpop.permute.xlu0 %806
    %v809 = vadd.f32 %v787, %v807
    %v810 = vadd.f32 %v790, %v807
    %812 = vrot.lane.b32.xlu0 %v802, 96
    %v813 = vpop.permute.xlu0 %812
    %v815 = vsel %vm157, %v795, 0
    %v817 = vsel %vm157, %v813, 0
    %819 = vmatpush.xpose.msra.mxu0 0.0
    %820 = vmatpush.xpose.msra.mxu0 0.0
    %821 = vmatpush.xpose.msra.mxu0 0.0
    %822 = vmatpush.xpose.msra.mxu0 0.0
    %823 = vmatpush.xpose.msra.mxu0 0.0
    %824 = vmatpush.xpose.msra.mxu0 0.0
    %825 = vmatpush.xpose.msra.mxu0 0.0
    %826 = vmatpush.xpose.msra.mxu0 0.0
    %827 = vmatpush.xpose.msra.mxu0 0.0
    %828 = vmatpush.xpose.msra.mxu0 0.0
    %829 = vmatpush.xpose.msra.mxu0 0.0
    %830 = vmatpush.xpose.msra.mxu0 0.0
    %831 = vmatpush.xpose.msra.mxu0 0.0
    %832 = vmatpush.xpose.msra.mxu0 0.0
    %833 = vmatpush.xpose.msra.mxu0 0.0
    %834 = vmatpush.xpose.msra.mxu0 %v817
    %835 = vmatmul.f32.gmra.mxu0 %v815
    %v836 = vpop.f32.mrf.mxu0
    %v837 = vadd.f32 0.0, %v836
    %838 = vdwg.mxu0
    %840 = vrot.lane.b32.xlu0 %v803, 96
    %v841 = vpop.permute.xlu0 %840
    %v843 = vsel %vm157, %v796, 0
    %v845 = vsel %vm157, %v841, 0
    %847 = vmatpush.xpose.msra.mxu0 0.0
    %848 = vmatpush.xpose.msra.mxu0 0.0
    %849 = vmatpush.xpose.msra.mxu0 0.0
    %850 = vmatpush.xpose.msra.mxu0 0.0
    %851 = vmatpush.xpose.msra.mxu0 0.0
    %852 = vmatpush.xpose.msra.mxu0 0.0
    %853 = vmatpush.xpose.msra.mxu0 0.0
    %854 = vmatpush.xpose.msra.mxu0 0.0
    %855 = vmatpush.xpose.msra.mxu0 0.0
    %856 = vmatpush.xpose.msra.mxu0 0.0
    %857 = vmatpush.xpose.msra.mxu0 0.0
    %858 = vmatpush.xpose.msra.mxu0 0.0
    %859 = vmatpush.xpose.msra.mxu0 0.0
    %860 = vmatpush.xpose.msra.mxu0 0.0
    %861 = vmatpush.xpose.msra.mxu0 0.0
    %862 = vmatpush.xpose.msra.mxu0 %v845
    %863 = vmatmul.f32.gmra.mxu0 %v843
    %v864 = vpop.f32.mrf.mxu0
    %v865 = vadd.f32 0.0, %v864
    %866 = vdwg.mxu0
    %v867 = vsel %vm211, %v837, -inf
    %868 = vmax.xlane.f32.xlu0 %v867
    %v869 = vpop.xlane.xlu0 %868
    %v870 = vsel %vm211, %v865, -inf
    %871 = vmax.xlane.f32.xlu0 %v870
    %v872 = vpop.xlane.xlu0 %871
    %v873 = vsub.f32 %v837, %v869
    %v874 = vsub.f32 %v865, %v872
    %v875 = vmul.f32 %v873, 1.442695
    %v876 = vpow.pop %v875
    %v877 = vmul.f32 %v874, 1.442695
    %v878 = vpow.pop %v877
    %v879 = vsel %vm211, %v876, 0.0
    %880 = vadd.xlane.f32.xlu0 %v879
    %v881 = vpop.xlane.xlu0 %880
    %v882 = vsel %vm211, %v878, 0.0
    %883 = vadd.xlane.f32.xlu0 %v882
    %v884 = vpop.xlane.xlu0 %883
    %v885 = vrcp.pop %v881
    %v886 = vrcp.pop %v884
    %v887 = vmul.f32 %v876, %v885
    %v888 = vmul.f32 %v878, %v886
    %890 = vrot.lane.b32.xlu0 %v809, 64
    %v891 = vpop.permute.xlu0 %890
    %v894 = vsel %vm211, %v887, 0
    %896 = vmatpush.msra.mxu0 0.0
    %897 = vmatpush.msra.mxu0 0.0
    %898 = vmatpush.msra.mxu0 0.0
    %899 = vmatpush.msra.mxu0 0.0
    %900 = vmatpush.msra.mxu0 0.0
    %901 = vmatpush.msra.mxu0 0.0
    %902 = vmatpush.msra.mxu0 0.0
    %903 = vmatpush.msra.mxu0 0.0
    %904 = vmatpush.msra.mxu0 0.0
    %905 = vmatpush.msra.mxu0 0.0
    %906 = vmatpush.msra.mxu0 0.0
    %907 = vmatpush.msra.mxu0 0.0
    %908 = vmatpush.msra.mxu0 0.0
    %909 = vmatpush.msra.mxu0 0.0
    %910 = vmatpush.msra.mxu0 0.0
    %911 = vmatpush.msra.mxu0 %v891
    %912 = vmatmul.f32.gmra.mxu0 %v894
    %v913 = vpop.f32.mrf.mxu0
    %v914 = vadd.f32 0.0, %v913
    %915 = vdwg.mxu0
    %917 = vrot.lane.b32.xlu0 %v810, 64
    %v918 = vpop.permute.xlu0 %917
    %v921 = vsel %vm211, %v888, 0
    %923 = vmatpush.msra.mxu0 0.0
    %924 = vmatpush.msra.mxu0 0.0
    %925 = vmatpush.msra.mxu0 0.0
    %926 = vmatpush.msra.mxu0 0.0
    %927 = vmatpush.msra.mxu0 0.0
    %928 = vmatpush.msra.mxu0 0.0
    %929 = vmatpush.msra.mxu0 0.0
    %930 = vmatpush.msra.mxu0 0.0
    %931 = vmatpush.msra.mxu0 0.0
    %932 = vmatpush.msra.mxu0 0.0
    %933 = vmatpush.msra.mxu0 0.0
    %934 = vmatpush.msra.mxu0 0.0
    %935 = vmatpush.msra.mxu0 0.0
    %936 = vmatpush.msra.mxu0 0.0
    %937 = vmatpush.msra.mxu0 0.0
    %938 = vmatpush.msra.mxu0 %v918
    %939 = vmatmul.f32.gmra.mxu0 %v921
    %v940 = vpop.f32.mrf.mxu0
    %v941 = vadd.f32 0.0, %v940
    %942 = vdwg.mxu0
    %943 = vrot.lane.b32.xlu0 %v795, 112
    %v944 = vpop.permute.xlu0 %943
    %945 = vrot.lane.b32.xlu0 %v802, 80
    %v946 = vpop.permute.xlu0 %945
    %v947 = vsel %vm157, %v944, 0
    %v949 = vsel %vm157, %v946, 0
    %951 = vmatpush.xpose.msra.mxu0 0.0
    %952 = vmatpush.xpose.msra.mxu0 0.0
    %953 = vmatpush.xpose.msra.mxu0 0.0
    %954 = vmatpush.xpose.msra.mxu0 0.0
    %955 = vmatpush.xpose.msra.mxu0 0.0
    %956 = vmatpush.xpose.msra.mxu0 0.0
    %957 = vmatpush.xpose.msra.mxu0 0.0
    %958 = vmatpush.xpose.msra.mxu0 0.0
    %959 = vmatpush.xpose.msra.mxu0 0.0
    %960 = vmatpush.xpose.msra.mxu0 0.0
    %961 = vmatpush.xpose.msra.mxu0 0.0
    %962 = vmatpush.xpose.msra.mxu0 0.0
    %963 = vmatpush.xpose.msra.mxu0 0.0
    %964 = vmatpush.xpose.msra.mxu0 0.0
    %965 = vmatpush.xpose.msra.mxu0 0.0
    %966 = vmatpush.xpose.msra.mxu0 %v949
    %967 = vmatmul.f32.gmra.mxu0 %v947
    %v968 = vpop.f32.mrf.mxu0
    %v969 = vadd.f32 0.0, %v968
    %970 = vdwg.mxu0
    %971 = vrot.lane.b32.xlu0 %v796, 112
    %v972 = vpop.permute.xlu0 %971
    %973 = vrot.lane.b32.xlu0 %v803, 80
    %v974 = vpop.permute.xlu0 %973
    %v975 = vsel %vm157, %v972, 0
    %v977 = vsel %vm157, %v974, 0
    %979 = vmatpush.xpose.msra.mxu0 0.0
    %980 = vmatpush.xpose.msra.mxu0 0.0
    %981 = vmatpush.xpose.msra.mxu0 0.0
    %982 = vmatpush.xpose.msra.mxu0 0.0
    %983 = vmatpush.xpose.msra.mxu0 0.0
    %984 = vmatpush.xpose.msra.mxu0 0.0
    %985 = vmatpush.xpose.msra.mxu0 0.0
    %986 = vmatpush.xpose.msra.mxu0 0.0
    %987 = vmatpush.xpose.msra.mxu0 0.0
    %988 = vmatpush.xpose.msra.mxu0 0.0
    %989 = vmatpush.xpose.msra.mxu0 0.0
    %990 = vmatpush.xpose.msra.mxu0 0.0
    %991 = vmatpush.xpose.msra.mxu0 0.0
    %992 = vmatpush.xpose.msra.mxu0 0.0
    %993 = vmatpush.xpose.msra.mxu0 0.0
    %994 = vmatpush.xpose.msra.mxu0 %v977
    %995 = vmatmul.f32.gmra.mxu0 %v975
    %v996 = vpop.f32.mrf.mxu0
    %v997 = vadd.f32 0.0, %v996
    %998 = vdwg.mxu0
    %v999 = vsel %vm211, %v969, -inf
    %1000 = vmax.xlane.f32.xlu0 %v999
    %v1001 = vpop.xlane.xlu0 %1000
    %v1002 = vsel %vm211, %v997, -inf
    %1003 = vmax.xlane.f32.xlu0 %v1002
    %v1004 = vpop.xlane.xlu0 %1003
    %v1005 = vsub.f32 %v969, %v1001
    %v1006 = vsub.f32 %v997, %v1004
    %v1007 = vmul.f32 %v1005, 1.442695
    %v1008 = vpow.pop %v1007
    %v1009 = vmul.f32 %v1006, 1.442695
    %v1010 = vpow.pop %v1009
    %v1011 = vsel %vm211, %v1008, 0.0
    %1012 = vadd.xlane.f32.xlu0 %v1011
    %v1013 = vpop.xlane.xlu0 %1012
    %v1014 = vsel %vm211, %v1010, 0.0
    %1015 = vadd.xlane.f32.xlu0 %v1014
    %v1016 = vpop.xlane.xlu0 %1015
    %v1017 = vrcp.pop %v1013
    %v1018 = vrcp.pop %v1016
    %v1019 = vmul.f32 %v1008, %v1017
    %v1020 = vmul.f32 %v1010, %v1018
    %1021 = vrot.lane.b32.xlu0 %v809, 48
    %v1022 = vpop.permute.xlu0 %1021
    %v1025 = vsel %vm211, %v1019, 0
    %1027 = vmatpush.msra.mxu0 0.0
    %1028 = vmatpush.msra.mxu0 0.0
    %1029 = vmatpush.msra.mxu0 0.0
    %1030 = vmatpush.msra.mxu0 0.0
    %1031 = vmatpush.msra.mxu0 0.0
    %1032 = vmatpush.msra.mxu0 0.0
    %1033 = vmatpush.msra.mxu0 0.0
    %1034 = vmatpush.msra.mxu0 0.0
    %1035 = vmatpush.msra.mxu0 0.0
    %1036 = vmatpush.msra.mxu0 0.0
    %1037 = vmatpush.msra.mxu0 0.0
    %1038 = vmatpush.msra.mxu0 0.0
    %1039 = vmatpush.msra.mxu0 0.0
    %1040 = vmatpush.msra.mxu0 0.0
    %1041 = vmatpush.msra.mxu0 0.0
    %1042 = vmatpush.msra.mxu0 %v1022
    %1043 = vmatmul.f32.gmra.mxu0 %v1025
    %v1044 = vpop.f32.mrf.mxu0
    %v1045 = vadd.f32 0.0, %v1044
    %1046 = vdwg.mxu0
    %1047 = vrot.lane.b32.xlu0 %v810, 48
    %v1048 = vpop.permute.xlu0 %1047
    %v1051 = vsel %vm211, %v1020, 0
    %1053 = vmatpush.msra.mxu0 0.0
    %1054 = vmatpush.msra.mxu0 0.0
    %1055 = vmatpush.msra.mxu0 0.0
    %1056 = vmatpush.msra.mxu0 0.0
    %1057 = vmatpush.msra.mxu0 0.0
    %1058 = vmatpush.msra.mxu0 0.0
    %1059 = vmatpush.msra.mxu0 0.0
    %1060 = vmatpush.msra.mxu0 0.0
    %1061 = vmatpush.msra.mxu0 0.0
    %1062 = vmatpush.msra.mxu0 0.0
    %1063 = vmatpush.msra.mxu0 0.0
    %1064 = vmatpush.msra.mxu0 0.0
    %1065 = vmatpush.msra.mxu0 0.0
    %1066 = vmatpush.msra.mxu0 0.0
    %1067 = vmatpush.msra.mxu0 0.0
    %1068 = vmatpush.msra.mxu0 %v1048
    %1069 = vmatmul.f32.gmra.mxu0 %v1051
    %v1070 = vpop.f32.mrf.mxu0
    %v1071 = vadd.f32 0.0, %v1070
    %1072 = vdwg.mxu0
    %1075 = vrot.lane.b32.xlu0 %v758, 32
    %v1076 = vpop.permute.xlu0 %1075
    %1077 = vrot.lane.b32.xlu0 %v759, 32
    %v1078 = vpop.permute.xlu0 %1077
    %v1082 = vsel %vm157, %v1045, 0
    %v1085 = vsel %vm157, %v1071, 0
    %1087 = vmatpush.msra.mxu0 0.0
    %1088 = vmatpush.msra.mxu0 0.0
    %1089 = vmatpush.msra.mxu0 0.0
    %1090 = vmatpush.msra.mxu0 0.0
    %1091 = vmatpush.msra.mxu0 0.0
    %1092 = vmatpush.msra.mxu0 0.0
    %1093 = vmatpush.msra.mxu0 0.0
    %1094 = vmatpush.msra.mxu0 0.0
    %1095 = vmatpush.msra.mxu0 0.0
    %1096 = vmatpush.msra.mxu0 0.0
    %1097 = vmatpush.msra.mxu0 0.0
    %1098 = vmatpush.msra.mxu0 0.0
    %1099 = vmatpush.msra.mxu0 0.0
    %1100 = vmatpush.msra.mxu0 0.0
    %1101 = vmatpush.msra.mxu0 %v1078
    %1102 = vmatpush.msra.mxu0 %v1076
    %1103 = vmatmul.f32.gmra.mxu0 %v1082
    %v1104 = vpop.f32.mrf.mxu0
    %v1105 = vadd.f32 0.0, %v1104
    %1106 = vmatmul.f32.gmra.mxu0 %v1085
    %v1107 = vpop.f32.mrf.mxu0
    %v1108 = vadd.f32 0.0, %v1107
    %1109 = vdwg.mxu0
    %1112 = vrot.lane.b32.xlu0 %v756, 32
    %v1113 = vpop.permute.xlu0 %1112
    %1114 = vrot.lane.b32.xlu0 %v757, 32
    %v1115 = vpop.permute.xlu0 %1114
    %v1119 = vsel %vm157, %v914, 0
    %v1122 = vsel %vm157, %v941, 0
    %1124 = vmatpush.msra.mxu0 0.0
    %1125 = vmatpush.msra.mxu0 0.0
    %1126 = vmatpush.msra.mxu0 0.0
    %1127 = vmatpush.msra.mxu0 0.0
    %1128 = vmatpush.msra.mxu0 0.0
    %1129 = vmatpush.msra.mxu0 0.0
    %1130 = vmatpush.msra.mxu0 0.0
    %1131 = vmatpush.msra.mxu0 0.0
    %1132 = vmatpush.msra.mxu0 0.0
    %1133 = vmatpush.msra.mxu0 0.0
    %1134 = vmatpush.msra.mxu0 0.0
    %1135 = vmatpush.msra.mxu0 0.0
    %1136 = vmatpush.msra.mxu0 0.0
    %1137 = vmatpush.msra.mxu0 0.0
    %1138 = vmatpush.msra.mxu0 %v1115
    %1139 = vmatpush.msra.mxu0 %v1113
    %1140 = vmatmul.f32.gmra.mxu0 %v1119
    %v1141 = vpop.f32.mrf.mxu0
    %v1142 = vadd.f32 %v1105, %v1141
    %1143 = vmatmul.f32.gmra.mxu0 %v1122
    %v1144 = vpop.f32.mrf.mxu0
    %v1145 = vadd.f32 %v1108, %v1144
    %1146 = vdwg.mxu0
    %v1147 = vperm.slane %v761, 3
    %v1148 = vadd.f32 %v1142, %v1147
    %v1149 = vadd.f32 %v1145, %v1147
    %v1150 = vadd.f32 %v753, %v1148
    %v1151 = vadd.f32 %v754, %v1149
    %v1152 = vsel %vm42, %v1150, 0.0
    %1153 = vadd.xlane.f32.xlu0 %v1152
    %v1154 = vpop.xlane.xlu0 %1153
    %v1155 = vsel %vm42, %v1151, 0.0
    %1156 = vadd.xlane.f32.xlu0 %v1155
    %v1157 = vpop.xlane.xlu0 %1156
    %v1158 = vmul.f32 %v1154, %v55
    %v1159 = vmul.f32 %v1157, %v55
    %v1160 = vsub.f32 %v1150, %v1158
    %v1161 = vsub.f32 %v1151, %v1159
    %v1162 = vmul.f32 %v1160, %v1160
    %v1163 = vmul.f32 %v1161, %v1161
    %v1164 = vsel %vm42, %v1162, 0.0
    %1165 = vadd.xlane.f32.xlu0 %v1164
    %v1166 = vpop.xlane.xlu0 %1165
    %v1167 = vsel %vm42, %v1163, 0.0
    %1168 = vadd.xlane.f32.xlu0 %v1167
    %v1169 = vpop.xlane.xlu0 %1168
    %v1170 = vmul.f32 %v1166, %v55
    %v1171 = vmul.f32 %v1169, %v55
    %v1172 = vadd.f32 %v1170, 1e-12
    %v1173 = vadd.f32 %v1171, 1e-12
    %v1174 = vrsqrt.pop %v1172
    %v1175 = vmul.f32 %v1174, %v1172
    %v1176 = vmul.f32 %v1175, %v1174
    %v1177 = vmul.f32 0.5, %v1176
    %v1178 = vsub.f32 1.5, %v1177
    %v1179 = vmul.f32 %v1174, %v1178
    %vm1180 = vweird.f32 %v1172
    %vm1181 = vweird.f32 %v1174
    %vm1182 = vmor %vm1180, %vm1181
    %v1183 = vsel %vm1182, %v1174, %v1179
    %v1184 = vrsqrt.pop %v1173
    %v1185 = vmul.f32 %v1184, %v1173
    %v1186 = vmul.f32 %v1185, %v1184
    %v1187 = vmul.f32 0.5, %v1186
    %v1188 = vsub.f32 1.5, %v1187
    %v1189 = vmul.f32 %v1184, %v1188
    %vm1190 = vweird.f32 %v1173
    %vm1191 = vweird.f32 %v1184
    %vm1192 = vmor %vm1190, %vm1191
    %v1193 = vsel %vm1192, %v1184, %v1189
    %v1194 = vmul.f32 %v1160, %v1183
    %v1195 = vmul.f32 %v1161, %v1193
    %v1196 = vperm.slane %v761, 4
    %v1197 = vmul.f32 %v1194, %v1196
    %v1198 = vmul.f32 %v1195, %v1196
    %v1199 = vperm.slane %v761, 5
    %v1200 = vadd.f32 %v1197, %v1199
    %v1201 = vadd.f32 %v1198, %v1199
    %s1202 = scalar_lea.vmem %s3, 32
    %v1203 = vld [vmem:[%s1202] sm:$0xff]
    %v1204 = vld [vmem:[%s1202 + $0x8] sm:$0xff]
    %v1205 = vld [vmem:[%s1202 + $0x10] sm:$0xff]
    %v1206 = vld [vmem:[%s1202 + $0x18] sm:$0xff]
    %s1207 = scalar_lea.vmem %s6, 1
    %v1208 = vld [vmem:[%s1207] sm:$0x1]
    %v1210 = vperm.slane %v1208, 0
    %v1213 = vsel %vm42, %v1200, 0
    %v1216 = vsel %vm42, %v1201, 0
    %1218 = vmatpush.msra.mxu0 0.0
    %1219 = vmatpush.msra.mxu0 0.0
    %1220 = vmatpush.msra.mxu0 0.0
    %1221 = vmatpush.msra.mxu0 0.0
    %1222 = vmatpush.msra.mxu0 0.0
    %1223 = vmatpush.msra.mxu0 0.0
    %1224 = vmatpush.msra.mxu0 0.0
    %1225 = vmatpush.msra.mxu0 0.0
    %1226 = vmatpush.msra.mxu0 0.0
    %1227 = vmatpush.msra.mxu0 0.0
    %1228 = vmatpush.msra.mxu0 0.0
    %1229 = vmatpush.msra.mxu0 0.0
    %1230 = vmatpush.msra.mxu0 %v1206
    %1231 = vmatpush.msra.mxu0 %v1205
    %1232 = vmatpush.msra.mxu0 %v1204
    %1233 = vmatpush.msra.mxu0 %v1203
    %1234 = vmatmul.f32.gmra.mxu0 %v1213
    %v1235 = vpop.f32.mrf.mxu0
    %v1236 = vadd.f32 %v1210, %v1235
    %1237 = vmatmul.f32.gmra.mxu0 %v1216
    %v1238 = vpop.f32.mrf.mxu0
    %v1239 = vadd.f32 %v1210, %v1238
    %1240 = vdwg.mxu0
    %v1241 = vmul.f32 %v1236, 0.5
    %v1242 = vmul.f32 %v1239, 0.5
    %v1243 = vmul.f32 %v1236, 0.70710677
    %v1244 = vmul.f32 %v1239, 0.70710677
    %vm1245 = vcmp.ge.f32.partialorder %v1243, 0.0
    %vm1246 = vcmp.ge.f32.partialorder %v1244, 0.0
    %v1247 = vsel %vm1245, 1.0, -1.0
    %v1248 = vsel %vm1246, 1.0, -1.0
    %v1249 = vand.u32 2147483647, %v1243
    %v1250 = vand.u32 2147483647, %v1244
    %v1251 = vmul.f32 %v1249, 0.3275911
    %v1252 = vmul.f32 %v1250, 0.3275911
    %v1253 = vadd.f32 %v1251, 1.0
    %v1254 = vadd.f32 %v1252, 1.0
    %v1255 = vrcp.pop %v1253
    %v1256 = vmul.f32 %v1253, %v1255
    %v1257 = vsub.f32 1.0, %v1256
    %v1258 = vmul.f32 %v1255, %v1257
    %v1259 = vadd.f32 %v1255, %v1258
    %vm1260 = vweird.f32 %v1253
    %vm1261 = vweird.f32 %v1255
    %vm1262 = vmor %vm1260, %vm1261
    %v1263 = vsel %vm1262, %v1255, %v1259
    %v1264 = vand.u32 2147483647, %v1253
    %vm1265 = vcmp.eq.f32.partialorder %v1264, 8.507059e+37
    %v1266 = vand.u32 %v1253, 2147483648
    %v1267 = vor.u32 1.1754944e-38, %v1266
    %v1268 = vsel %vm1265, %v1267, %v1263
    %v1269 = vmul.f32 1.0, %v1268
    %v1270 = vrcp.pop %v1254
    %v1271 = vmul.f32 %v1254, %v1270
    %v1272 = vsub.f32 1.0, %v1271
    %v1273 = vmul.f32 %v1270, %v1272
    %v1274 = vadd.f32 %v1270, %v1273
    %vm1275 = vweird.f32 %v1254
    %vm1276 = vweird.f32 %v1270
    %vm1277 = vmor %vm1275, %vm1276
    %v1278 = vsel %vm1277, %v1270, %v1274
    %v1279 = vand.u32 2147483647, %v1254
    %vm1280 = vcmp.eq.f32.partialorder %v1279, 8.507059e+37
    %v1281 = vand.u32 %v1254, 2147483648
    %v1282 = vor.u32 1.1754944e-38, %v1281
    %v1283 = vsel %vm1280, %v1282, %v1278
    %v1284 = vmul.f32 1.0, %v1283
    %v1285 = vmul.f32 %v1269, 1.0614054
    %v1286 = vmul.f32 %v1284, 1.0614054
    %v1287 = vadd.f32 %v1285, -1.4531521
    %v1288 = vadd.f32 %v1286, -1.4531521
    %v1289 = vmul.f32 %v1287, %v1269
    %v1290 = vmul.f32 %v1288, %v1284
    %v1291 = vadd.f32 %v1289, 1.4214138
    %v1292 = vadd.f32 %v1290, 1.4214138
    %v1293 = vmul.f32 %v1291, %v1269
    %v1294 = vmul.f32 %v1292, %v1284
    %v1295 = vadd.f32 %v1293, -0.28449672
    %v1296 = vadd.f32 %v1294, -0.28449672
    %v1297 = vmul.f32 %v1295, %v1269
    %v1298 = vmul.f32 %v1296, %v1284
    %v1299 = vadd.f32 %v1297, 0.2548296
    %v1300 = vadd.f32 %v1298, 0.2548296
    %v1301 = vmul.f32 %v1299, %v1269
    %v1302 = vmul.f32 %v1300, %v1284
    %v1303 = vsub.f32 0.0, %v1249
    %v1304 = vsub.f32 0.0, %v1250
    %v1305 = vmul.f32 %v1303, %v1249
    %v1306 = vmul.f32 %v1304, %v1250
    %v1307 = vmul.f32 %v1305, 1.442695
    %v1308 = vpow.pop %v1307
    %v1309 = vmul.f32 %v1306, 1.442695
    %v1310 = vpow.pop %v1309
    %v1311 = vmul.f32 %v1301, %v1308
    %v1312 = vmul.f32 %v1302, %v1310
    %v1313 = vsub.f32 1.0, %v1311
    %v1314 = vsub.f32 1.0, %v1312
    %v1315 = vmul.f32 %v1247, %v1313
    %v1316 = vmul.f32 %v1248, %v1314
    %v1317 = vadd.f32 %v1315, 1.0
    %v1318 = vadd.f32 %v1316, 1.0
    %v1319 = vmul.f32 %v1241, %v1317
    %v1320 = vmul.f32 %v1242, %v1318
    %s1321 = scalar_lea.vmem %s4, 64
    %v1322 = vld [vmem:[%s1321] sm:$0xff]
    %v1323 = vld [vmem:[%s1321 + $0x8] sm:$0xff]
    %v1324 = vld [vmem:[%s1321 + $0x10] sm:$0xff]
    %v1325 = vld [vmem:[%s1321 + $0x18] sm:$0xff]
    %v1326 = vld [vmem:[%s1321 + $0x20] sm:$0xff]
    %v1327 = vld [vmem:[%s1321 + $0x28] sm:$0xff]
    %v1328 = vld [vmem:[%s1321 + $0x30] sm:$0xff]
    %v1329 = vld [vmem:[%s1321 + $0x38] sm:$0xff]
    %v1330 = vperm.slane %v761, 6
    %v1332 = vsel %vm673, %v1319, 0
    %v1335 = vsel %vm673, %v1320, 0
    %1337 = vmatpush.msra.mxu0 0.0
    %1338 = vmatpush.msra.mxu0 0.0
    %1339 = vmatpush.msra.mxu0 0.0
    %1340 = vmatpush.msra.mxu0 0.0
    %1341 = vmatpush.msra.mxu0 0.0
    %1342 = vmatpush.msra.mxu0 0.0
    %1343 = vmatpush.msra.mxu0 0.0
    %1344 = vmatpush.msra.mxu0 0.0
    %1345 = vmatpush.msra.mxu0 %v1329
    %1346 = vmatpush.msra.mxu0 %v1328
    %1347 = vmatpush.msra.mxu0 %v1327
    %1348 = vmatpush.msra.mxu0 %v1326
    %1349 = vmatpush.msra.mxu0 %v1325
    %1350 = vmatpush.msra.mxu0 %v1324
    %1351 = vmatpush.msra.mxu0 %v1323
    %1352 = vmatpush.msra.mxu0 %v1322
    %1353 = vmatmul.f32.gmra.mxu0 %v1332
    %v1354 = vpop.f32.mrf.mxu0
    %v1355 = vadd.f32 %v1330, %v1354
    %1356 = vmatmul.f32.gmra.mxu0 %v1335
    %v1357 = vpop.f32.mrf.mxu0
    %v1358 = vadd.f32 %v1330, %v1357
    %1359 = vdwg.mxu0
    %v1360 = vadd.f32 %v1200, %v1355
    %v1361 = vadd.f32 %v1201, %v1358
    %v1362 = vsel %vm42, %v1360, 0.0
    %1363 = vadd.xlane.f32.xlu0 %v1362
    %v1364 = vpop.xlane.xlu0 %1363
    %v1365 = vsel %vm42, %v1361, 0.0
    %1366 = vadd.xlane.f32.xlu0 %v1365
    %v1367 = vpop.xlane.xlu0 %1366
    %v1368 = vmul.f32 %v1364, %v55
    %v1369 = vmul.f32 %v1367, %v55
    %v1370 = vsub.f32 %v1360, %v1368
    %v1371 = vsub.f32 %v1361, %v1369
    %v1372 = vmul.f32 %v1370, %v1370
    %v1373 = vmul.f32 %v1371, %v1371
    %v1374 = vsel %vm42, %v1372, 0.0
    %1375 = vadd.xlane.f32.xlu0 %v1374
    %v1376 = vpop.xlane.xlu0 %1375
    %v1377 = vsel %vm42, %v1373, 0.0
    %1378 = vadd.xlane.f32.xlu0 %v1377
    %v1379 = vpop.xlane.xlu0 %1378
    %v1380 = vmul.f32 %v1376, %v55
    %v1381 = vmul.f32 %v1379, %v55
    %v1382 = vadd.f32 %v1380, 1e-12
    %v1383 = vadd.f32 %v1381, 1e-12
    %v1384 = vrsqrt.pop %v1382
    %v1385 = vmul.f32 %v1384, %v1382
    %v1386 = vmul.f32 %v1385, %v1384
    %v1387 = vmul.f32 0.5, %v1386
    %v1388 = vsub.f32 1.5, %v1387
    %v1389 = vmul.f32 %v1384, %v1388
    %vm1390 = vweird.f32 %v1382
    %vm1391 = vweird.f32 %v1384
    %vm1392 = vmor %vm1390, %vm1391
    %v1393 = vsel %vm1392, %v1384, %v1389
    %v1394 = vrsqrt.pop %v1383
    %v1395 = vmul.f32 %v1394, %v1383
    %v1396 = vmul.f32 %v1395, %v1394
    %v1397 = vmul.f32 0.5, %v1396
    %v1398 = vsub.f32 1.5, %v1397
    %v1399 = vmul.f32 %v1394, %v1398
    %vm1400 = vweird.f32 %v1383
    %vm1401 = vweird.f32 %v1394
    %vm1402 = vmor %vm1400, %vm1401
    %v1403 = vsel %vm1402, %v1394, %v1399
    %v1404 = vmul.f32 %v1370, %v1393
    %v1405 = vmul.f32 %v1371, %v1403
    %v1406 = vperm.slane %v761, 7
    %v1407 = vmul.f32 %v1404, %v1406
    %v1408 = vmul.f32 %v1405, %v1406
    %v1409 = vperm.slane %v762, 0
    %v1410 = vadd.f32 %v1407, %v1409
    %v1411 = vadd.f32 %v1408, %v1409
    %v1412 = vld [vmem:[%s7] sm:$0xff]
    %v1413 = vld [vmem:[%s7 + $0x8] sm:$0xff]
    %v1414 = vld [vmem:[%s7 + $0x10] sm:$0xff]
    %v1415 = vld [vmem:[%s7 + $0x18] sm:$0xff]
    %v1416 = vld [vmem:[%s8] sm:$0x1]
    %v1418 = vperm.slane %v1416, 0
    %v1422 = vrot.slane %v1411, 7
    %vm1423 = vcmask 1041409
    %v1424 = vsel %vm1423, %v1422, %v1410
    %v1425 = vsel %vm42, %v1424, 0
    %1427 = vmatpush.msra.mxu0 0.0
    %1428 = vmatpush.msra.mxu0 0.0
    %1429 = vmatpush.msra.mxu0 0.0
    %1430 = vmatpush.msra.mxu0 0.0
    %1431 = vmatpush.msra.mxu0 0.0
    %1432 = vmatpush.msra.mxu0 0.0
    %1433 = vmatpush.msra.mxu0 0.0
    %1434 = vmatpush.msra.mxu0 0.0
    %1435 = vmatpush.msra.mxu0 0.0
    %1436 = vmatpush.msra.mxu0 0.0
    %1437 = vmatpush.msra.mxu0 0.0
    %1438 = vmatpush.msra.mxu0 0.0
    %1439 = vmatpush.msra.mxu0 %v1415
    %1440 = vmatpush.msra.mxu0 %v1414
    %1441 = vmatpush.msra.mxu0 %v1413
    %1442 = vmatpush.msra.mxu0 %v1412
    %1443 = vmatmul.f32.gmra.mxu0 %v1425
    %v1444 = vpop.f32.mrf.mxu0
    %v1445 = vadd.f32 %v1418, %v1444
    %1446 = vdwg.mxu0
    %v1447 = vtanh.pop %v1445
    %v1448 = vld [vmem:[%s9] sm:$0xff]
    %v1449 = vld [vmem:[%s9 + $0x8] sm:$0xff]
    %v1450 = vld [vmem:[%s9 + $0x10] sm:$0xff]
    %v1451 = vld [vmem:[%s9 + $0x18] sm:$0xff]
    %v1452 = vld [vmem:[%s10] sm:$0x1]
    %v1454 = vperm.slane %v1452, 0
    %v1457 = vsel %vm42, %v1447, 0
    %1459 = vmatpush.msra.mxu0 0.0
    %1460 = vmatpush.msra.mxu0 0.0
    %1461 = vmatpush.msra.mxu0 0.0
    %1462 = vmatpush.msra.mxu0 0.0
    %1463 = vmatpush.msra.mxu0 0.0
    %1464 = vmatpush.msra.mxu0 0.0
    %1465 = vmatpush.msra.mxu0 0.0
    %1466 = vmatpush.msra.mxu0 0.0
    %1467 = vmatpush.msra.mxu0 0.0
    %1468 = vmatpush.msra.mxu0 0.0
    %1469 = vmatpush.msra.mxu0 0.0
    %1470 = vmatpush.msra.mxu0 0.0
    %1471 = vmatpush.msra.mxu0 %v1451
    %1472 = vmatpush.msra.mxu0 %v1450
    %1473 = vmatpush.msra.mxu0 %v1449
    %1474 = vmatpush.msra.mxu0 %v1448
    %1475 = vmatmul.f32.gmra.mxu0 %v1457
    %v1476 = vpop.f32.mrf.mxu0
    %v1477 = vadd.f32 %v1454, %v1476
    %1478 = vdwg.mxu0
    %1479 = vst [vmem:[#allocation2] sm:$0x3] %v1477
    // Predicated region
    $region46: #{tpu_custom_call.1} parent=1 // pred_check
      _
    $region47: #{tpu_custom_call.1} parent=1 // pred_check_branch
      %1481 = sbr.rel (0) target = $region49
    $region48: #{tpu_custom_call.1} parent=1 // pred_region
      %1483 = vsyncadd [#allocation3], 0
      %s1485 = sshll.u32 [#allocation2], 4
      %s1486 = int_to_ptr.vmem [resolvable:$true] %s1485
      %s1487 = sshll.u32 %s11, 4
      %s1488 = int_to_ptr.hbm [resolvable:$true] %s1487
      %1490 = dma.vmem_to_hbm [thread:$0]  %s1486, 32, %s1488, [#allocation3]
    $region49: #{tpu_custom_call.1} parent=1 // pred_fallthru
      _
    // Predicated region
    $region50: #{tpu_custom_call.1} parent=1 // pred_check
      _
    $region51: #{tpu_custom_call.1} parent=1 // pred_check_branch
      %1492 = sbr.rel (0) target = $region53
    $region52: #{tpu_custom_call.1} parent=1 // pred_region
      %1494 = dma.done [#allocation3], 32
    $region53: #{tpu_custom_call.1} parent=1 // pred_fallthru
      _
    %1495 = vsyncpa [#allocation3], 1

</llo_original>
